<compile_context>
chip_gen: v7x
topology: tpu7x:2x2x1
jax: 0.10.0
libtpu: 0.0.40
codegen_flags: <defaults>
</compile_context>

<pallas_src>
import functools

import jax
import jax.numpy as jnp
from jax import lax
from jax.experimental import pallas as pl
from jax.experimental.pallas import tpu as pltpu

LANE = 128
SUBLANE = 8


def _round_up(x, m):
    return (x + m - 1) // m * m


def rnn_classifier_kernel(tok_ref, table_ref, wih_ref, whh_ref, b_ref, wfc_ref,
                          bfc_ref, out_ref, pre_ref, *, seq_len):
    """One batch block; the whole (chunked) sequence is processed in one invocation.

    tok_ref : (n_chunks, NB, TC) int32 token ids (time padded to n_chunks*TC)
    table_ref: (Vp, Dp)  zero-padded embedding table (VMEM resident)
    wih_ref : (Dp, Hp)   W_ih^T (zero padded)
    whh_ref : (Hp, Hp)   W_hh^T (zero padded)
    b_ref   : (1, Hp)    b_ih + b_hh (zero padded)
    wfc_ref : (Hp, 128)  W_fc^T in lane 0, zeros elsewhere
    bfc_ref : (1, 128)   b_fc in lane 0
    out_ref : (NB, 128)  lane-dense logits (real logit in lane 0)
    pre_ref : (TC, NB, Hp) VMEM scratch for one time-chunk of the input projection
    """
    n_chunks, NB, TC = tok_ref.shape
    Vp = table_ref.shape[0]
    Hp = whh_ref.shape[1]

    n_full = seq_len // TC          # static
    rem = seq_len % TC              # static; padded time steps are never executed

    # Hoisted constant (don't rebuild broadcasts inside loops).
    vocab_iota = lax.broadcasted_iota(jnp.int32, (NB, Vp), 1)

    def project_and_scan(h, tok_chunk, nsteps):
        # tok_chunk: (NB, TC) int32; only the first `nsteps` (static) columns are real.
        # Gather + input projection hoisted off the serial recurrence into per-step
        # MXU matmuls that fill the chunk-sized pre_ref scratch.
        for t in range(nsteps):                                  # static lane slices
            onehot = (tok_chunk[:, t:t + 1] == vocab_iota).astype(jnp.float32)  # (NB, Vp)
            x_t = jnp.dot(onehot, table_ref[...],
                          preferred_element_type=jnp.float32)    # (NB, Dp) exact gather
            pre_ref[t] = (jnp.dot(x_t, wih_ref[...],
                                  preferred_element_type=jnp.float32)
                          + b_ref[...])                          # (NB, Hp)

        def step(t, hh):
            # Serial recurrence; hh stays in vregs as the loop carry, W_hh is re-read
            # from VMEM each step (cheap vld, keeps vreg pressure low).
            return jnp.tanh(pre_ref[t]
                            + jnp.dot(hh, whh_ref[...],
                                      preferred_element_type=jnp.float32))

        return lax.fori_loop(0, nsteps, step, h, unroll=min(nsteps, 8))

    h = jnp.zeros((NB, Hp), jnp.float32)

    if n_full > 0:
        def chunk_body(c, hh):
            return project_and_scan(hh, tok_ref[c], TC)
        h = lax.fori_loop(0, n_full, chunk_body, h)
    if rem > 0:
        h = project_and_scan(h, tok_ref[n_full], rem)

    # Lane-dense final projection (real logit in lane 0, rest zeros).
    out_ref[...] = (jnp.dot(h, wfc_ref[...], preferred_element_type=jnp.float32)
                    + bfc_ref[...])


def rnn_binary_classification_forward(tokens, emb_matrix, w_ih, w_hh, b_ih,
                                      b_hh, w_fc, b_fc, *, block_n=None,
                                      time_chunk=64):
    """tokens: (N, L) int32 token ids. Returns logits (N, 1) float32."""
    N, L = tokens.shape
    V, D = emb_matrix.shape
    H = w_hh.shape[0]

    Dp = _round_up(D, LANE)
    Hp = _round_up(H, LANE)
    Vp = _round_up(V, LANE)
    OUTp = LANE

    # >=2 batch blocks when possible so the single "parallel" axis can use both
    # TensorCores on v7x; cap at 128 (raise on v5e/v6e for very large N if desired).
    if block_n is None:
        block_n = min(_round_up(pl.cdiv(N, 2), SUBLANE), 128)
    block_n = _round_up(block_n, SUBLANE)
    Np = _round_up(N, block_n)

    TC = max(1, min(time_chunk, L))
    n_chunks = pl.cdiv(L, TC)
    Lp = n_chunks * TC

    # ---- wrapper glue: only the tiny int32 token tensor is padded / transposed ----
    # NOTE: padded batch rows reuse token id 0 (== padding_idx, a valid index); their
    # garbage logits are sliced off below. Padded time steps are never executed.
    tok = tokens.astype(jnp.int32)
    if Np != N:
        tok = jnp.pad(tok, ((0, Np - N), (0, 0)))
    if Lp != L:
        tok = jnp.pad(tok, ((0, 0), (0, Lp - L)))
    tok = tok.reshape(Np, n_chunks, TC).transpose(1, 0, 2)       # (n_chunks, Np, TC)

    table_p = jnp.zeros((Vp, Dp), jnp.float32).at[:V, :D].set(emb_matrix.astype(jnp.float32))
    wih_p = jnp.zeros((Dp, Hp), jnp.float32).at[:D, :H].set(w_ih.T.astype(jnp.float32))
    whh_p = jnp.zeros((Hp, Hp), jnp.float32).at[:H, :H].set(w_hh.T.astype(jnp.float32))
    b_p = jnp.zeros((1, Hp), jnp.float32).at[0, :H].set((b_ih + b_hh).astype(jnp.float32))
    wfc_p = jnp.zeros((Hp, OUTp), jnp.float32).at[:H, 0].set(w_fc.reshape(-1).astype(jnp.float32))
    bfc_p = jnp.zeros((1, OUTp), jnp.float32).at[0, 0].set(b_fc.reshape(()).astype(jnp.float32))

    # Explicit VMEM budget from the actual resident buffers (+ headroom), capped at
    # v7x's 64 MiB physical VMEM.
    weight_bytes = 4 * (Vp * Dp + Dp * Hp + Hp * Hp + Hp + Hp * OUTp + OUTp)
    tok_bytes = 4 * n_chunks * block_n * TC
    out_bytes = 4 * block_n * OUTp
    pre_bytes = 4 * TC * block_n * Hp
    resident = 2 * (weight_bytes + tok_bytes + out_bytes) + pre_bytes
    vmem_limit = int(min(64 * 2**20, max(2 * resident + (4 << 20), 16 << 20)))

    grid = (Np // block_n,)
    out = pl.pallas_call(
        functools.partial(rnn_classifier_kernel, seq_len=L),
        out_shape=jax.ShapeDtypeStruct((Np, OUTp), jnp.float32),
        grid_spec=pltpu.PrefetchScalarGridSpec(
            num_scalar_prefetch=0,
            grid=grid,
            in_specs=[
                pl.BlockSpec((n_chunks, block_n, TC), lambda i: (0, i, 0)),  # tokens
                pl.BlockSpec((Vp, Dp), lambda i: (0, 0)),    # embedding table (resident)
                pl.BlockSpec((Dp, Hp), lambda i: (0, 0)),    # W_ih^T
                pl.BlockSpec((Hp, Hp), lambda i: (0, 0)),    # W_hh^T
                pl.BlockSpec((1, Hp), lambda i: (0, 0)),     # b_ih + b_hh
                pl.BlockSpec((Hp, OUTp), lambda i: (0, 0)),  # W_fc^T (lane 0)
                pl.BlockSpec((1, OUTp), lambda i: (0, 0)),   # b_fc
            ],
            out_specs=pl.BlockSpec((block_n, OUTp), lambda i: (i, 0)),
            scratch_shapes=[pltpu.VMEM((TC, block_n, Hp), jnp.float32)],
        ),
        compiler_params=pltpu.CompilerParams(
            dimension_semantics=("parallel",),     # independent batch blocks
            vmem_limit_bytes=vmem_limit,
        ),
    )(tok, table_p, wih_p, whh_p, b_p, wfc_p, bfc_p)

    return out[:N, :1]


# ---- training-side helpers (plain JAX scalar reductions; not worth a kernel) ----
def bce_with_logits_loss(logits, targets):
    t = targets.astype(jnp.float32)
    return jnp.mean(jnp.maximum(logits, 0.0) - logits * t
                    + jnp.log1p(jnp.exp(-jnp.abs(logits))))


def accuracy(logits, targets):
    preds = (logits > 0).astype(jnp.int32)
    return jnp.mean((preds == targets.astype(jnp.int32)).astype(jnp.float32))


def reference_forward(tokens, emb_matrix, w_ih, w_hh, b_ih, b_hh, w_fc, b_fc):
    """Pure-JAX reference matching torch nn.Embedding -> nn.RNN -> nn.Linear."""
    hp = jax.lax.Precision.HIGHEST
    x = jnp.take(emb_matrix, tokens, axis=0).astype(jnp.float32)   # (N, L, D)
    N, L, D = x.shape
    H = w_hh.shape[0]
    h = jnp.zeros((N, H), jnp.float32)
    for t in range(L):
        h = jnp.tanh(jnp.dot(x[:, t, :], w_ih.T, precision=hp) + b_ih
                     + jnp.dot(h, w_hh.T, precision=hp) + b_hh)
    return jnp.dot(h, w_fc.T, precision=hp) + b_fc


if __name__ == "__main__":
    # Small deterministic problem sizes.
    vocab_size = 100
    embedding_dim = 32   # D
    hidden_size = 32     # H
    N = 8                # batch
    L = 8                # max_sequence_length

    key = jax.random.PRNGKey(0)
    k_emb, k_tok, k_tgt, k1, k2, k3, k4, k5, k6 = jax.random.split(key, 9)

    # Embedding matrix (row 0 is the padding row).
    emb_matrix = jax.random.normal(k_emb, (vocab_size, embedding_dim), jnp.float32)
    emb_matrix = emb_matrix.at[0].set(0.0)

    # RNN / linear parameters, uniform(-1/sqrt(H), 1/sqrt(H)) like torch defaults.
    bound = 1.0 / jnp.sqrt(hidden_size)
    w_ih = jax.random.uniform(k1, (hidden_size, embedding_dim), jnp.float32, -bound, bound)
    w_hh = jax.random.uniform(k2, (hidden_size, hidden_size), jnp.float32, -bound, bound)
    b_ih = jax.random.uniform(k3, (hidden_size,), jnp.float32, -bound, bound)
    b_hh = jax.random.uniform(k4, (hidden_size,), jnp.float32, -bound, bound)
    w_fc = jax.random.uniform(k5, (1, hidden_size), jnp.float32, -bound, bound)
    b_fc = jax.random.uniform(k6, (1,), jnp.float32, -bound, bound)

    # Token indices (N, max_sequence_length), 0 = padding index.
    tokens = jax.random.randint(k_tok, (N, L), 0, vocab_size, jnp.int32)
    targets = jax.random.randint(k_tgt, (N, 1), 0, 2, jnp.int32)

    logits = rnn_binary_classification_forward(
        tokens, emb_matrix, w_ih, w_hh, b_ih, b_hh, w_fc, b_fc)
    logits = jax.block_until_ready(logits)

    ref = reference_forward(tokens, emb_matrix, w_ih, w_hh, b_ih, b_hh, w_fc, b_fc)
    assert logits.shape == (N, 1)
    assert jnp.allclose(logits, ref, atol=1e-4, rtol=1e-4), (logits, ref)

    # Exercise the (plain-JAX) loss/accuracy helpers.
    _ = jax.block_until_ready(bce_with_logits_loss(logits, targets))
    _ = jax.block_until_ready(accuracy(logits, targets))

    print("KERNEL_OK")
</pallas_src>

<mosaic_0001>
module attributes {stable_mosaic.version = 11 : i64} {
  func.func @rnn_classifier_kernel(%arg0: i32, %arg1: memref<1x8x8xi32, #tpu.memory_space<vmem>>, %arg2: memref<128x128xf32, #tpu.memory_space<vmem>>, %arg3: memref<128x128xf32, #tpu.memory_space<vmem>>, %arg4: memref<128x128xf32, #tpu.memory_space<vmem>>, %arg5: memref<1x128xf32, #tpu.memory_space<vmem>>, %arg6: memref<128x128xf32, #tpu.memory_space<vmem>>, %arg7: memref<1x128xf32, #tpu.memory_space<vmem>>, %arg8: memref<8x128xf32, #tpu.memory_space<vmem>>, %arg9: memref<8x8x128xf32, #tpu.memory_space<vmem>>) attributes {dimension_semantics = [#tpu.dimension_semantics<parallel>], iteration_bounds = array<i64: 1>, scalar_prefetch = 0 : i64, scratch_operands = 1 : i64, tpu.core_type = #tpu.core_type<tc>, window_params = [{transform_indices = @transform_0, window_bounds = array<i64: 1, 8, 8>}, {pipeline_mode = #tpu.pipeline_mode<synchronous>, transform_indices = @transform_1, window_bounds = array<i64: 128, 128>}, {pipeline_mode = #tpu.pipeline_mode<synchronous>, transform_indices = @transform_2, window_bounds = array<i64: 128, 128>}, {pipeline_mode = #tpu.pipeline_mode<synchronous>, transform_indices = @transform_3, window_bounds = array<i64: 128, 128>}, {pipeline_mode = #tpu.pipeline_mode<synchronous>, transform_indices = @transform_4, window_bounds = array<i64: 1, 128>}, {pipeline_mode = #tpu.pipeline_mode<synchronous>, transform_indices = @transform_5, window_bounds = array<i64: 128, 128>}, {pipeline_mode = #tpu.pipeline_mode<synchronous>, transform_indices = @transform_6, window_bounds = array<i64: 1, 128>}, {transform_indices = @transform_7, window_bounds = array<i64: 8, 128>}]} {
    %0 = tpu.iota {dimensions = array<i32: 1>} : vector<8x128xi32>
    %cst = arith.constant 0.000000e+00 : f32
    %1 = vector.broadcast %cst : f32 to vector<8x128xf32>
    %c0_i32 = arith.constant 0 : i32
    %2 = arith.index_cast %c0_i32 : i32 to index
    %c0 = arith.constant 0 : index
    %c0_0 = arith.constant 0 : index
    %3 = vector.load %arg1[%2, %c0, %c0_0] : memref<1x8x8xi32, #tpu.memory_space<vmem>>, vector<1x8x8xi32>
    %4 = vector.shape_cast %3 : vector<1x8x8xi32> to vector<8x8xi32>
    %5 = vector.extract_strided_slice %4 {offsets = [0, 0], sizes = [8, 1], strides = [1, 1]} : vector<8x8xi32> to vector<8x1xi32>
    %6 = vector.broadcast %5 : vector<8x1xi32> to vector<8x128xi32>
    %7 = arith.cmpi eq, %6, %0 : vector<8x128xi32>
    %8 = arith.extui %7 : vector<8x128xi1> to vector<8x128xi32>
    %9 = arith.sitofp %8 : vector<8x128xi32> to vector<8x128xf32>
    %c0_1 = arith.constant 0 : index
    %c0_2 = arith.constant 0 : index
    %10 = vector.load %arg2[%c0_1, %c0_2] : memref<128x128xf32, #tpu.memory_space<vmem>>, vector<128x128xf32>
    %cst_3 = arith.constant dense<0.000000e+00> : vector<8x128xf32>
    %11 = tpu.matmul %9, %10, %cst_3 {dimension_numbers = #tpu.dot_dimension_numbers<[1], [0], [0], [1], [0, 0, 1, 1], [], []>} : vector<8x128xf32>, vector<128x128xf32>, vector<8x128xf32> -> vector<8x128xf32>
    %c0_4 = arith.constant 0 : index
    %c0_5 = arith.constant 0 : index
    %12 = vector.load %arg3[%c0_4, %c0_5] : memref<128x128xf32, #tpu.memory_space<vmem>>, vector<128x128xf32>
    %cst_6 = arith.constant dense<0.000000e+00> : vector<8x128xf32>
    %13 = tpu.matmul %11, %12, %cst_6 {dimension_numbers = #tpu.dot_dimension_numbers<[1], [0], [0], [1], [0, 0, 1, 1], [], []>} : vector<8x128xf32>, vector<128x128xf32>, vector<8x128xf32> -> vector<8x128xf32>
    %c0_7 = arith.constant 0 : index
    %c0_8 = arith.constant 0 : index
    %14 = vector.load %arg5[%c0_7, %c0_8] : memref<1x128xf32, #tpu.memory_space<vmem>>, vector<1x128xf32>
    %15 = vector.broadcast %14 : vector<1x128xf32> to vector<8x128xf32>
    %16 = arith.addf %13, %15 : vector<8x128xf32>
    %c0_9 = arith.constant 0 : index
    %c0_10 = arith.constant 0 : index
    %c0_11 = arith.constant 0 : index
    %17 = vector.load %arg9[%c0_9, %c0_10, %c0_11] : memref<8x8x128xf32, #tpu.memory_space<vmem>>, vector<1x8x128xf32>
    %18 = vector.shape_cast %17 : vector<1x8x128xf32> to vector<8x128xf32>
    %19 = vector.shape_cast %16 : vector<8x128xf32> to vector<1x8x128xf32>
    tpu.vector_store %arg9[%c0_9, %c0_10, %c0_11], %19 {strides = array<i32>} : memref<8x8x128xf32, #tpu.memory_space<vmem>>, vector<1x8x128xf32>,
    %20 = vector.extract_strided_slice %4 {offsets = [0, 1], sizes = [8, 1], strides = [1, 1]} : vector<8x8xi32> to vector<8x1xi32>
    %21 = vector.broadcast %20 : vector<8x1xi32> to vector<8x128xi32>
    %22 = arith.cmpi eq, %21, %0 : vector<8x128xi32>
    %23 = arith.extui %22 : vector<8x128xi1> to vector<8x128xi32>
    %24 = arith.sitofp %23 : vector<8x128xi32> to vector<8x128xf32>
    %c0_12 = arith.constant 0 : index
    %c0_13 = arith.constant 0 : index
    %25 = vector.load %arg2[%c0_12, %c0_13] : memref<128x128xf32, #tpu.memory_space<vmem>>, vector<128x128xf32>
    %cst_14 = arith.constant dense<0.000000e+00> : vector<8x128xf32>
    %26 = tpu.matmul %24, %25, %cst_14 {dimension_numbers = #tpu.dot_dimension_numbers<[1], [0], [0], [1], [0, 0, 1, 1], [], []>} : vector<8x128xf32>, vector<128x128xf32>, vector<8x128xf32> -> vector<8x128xf32>
    %c0_15 = arith.constant 0 : index
    %c0_16 = arith.constant 0 : index
    %27 = vector.load %arg3[%c0_15, %c0_16] : memref<128x128xf32, #tpu.memory_space<vmem>>, vector<128x128xf32>
    %cst_17 = arith.constant dense<0.000000e+00> : vector<8x128xf32>
    %28 = tpu.matmul %26, %27, %cst_17 {dimension_numbers = #tpu.dot_dimension_numbers<[1], [0], [0], [1], [0, 0, 1, 1], [], []>} : vector<8x128xf32>, vector<128x128xf32>, vector<8x128xf32> -> vector<8x128xf32>
    %c0_18 = arith.constant 0 : index
    %c0_19 = arith.constant 0 : index
    %29 = vector.load %arg5[%c0_18, %c0_19] : memref<1x128xf32, #tpu.memory_space<vmem>>, vector<1x128xf32>
    %30 = vector.broadcast %29 : vector<1x128xf32> to vector<8x128xf32>
    %31 = arith.addf %28, %30 : vector<8x128xf32>
    %c1 = arith.constant 1 : index
    %c0_20 = arith.constant 0 : index
    %c0_21 = arith.constant 0 : index
    %32 = vector.load %arg9[%c1, %c0_20, %c0_21] : memref<8x8x128xf32, #tpu.memory_space<vmem>>, vector<1x8x128xf32>
    %33 = vector.shape_cast %32 : vector<1x8x128xf32> to vector<8x128xf32>
    %34 = vector.shape_cast %31 : vector<8x128xf32> to vector<1x8x128xf32>
    tpu.vector_store %arg9[%c1, %c0_20, %c0_21], %34 {strides = array<i32>} : memref<8x8x128xf32, #tpu.memory_space<vmem>>, vector<1x8x128xf32>,
    %35 = vector.extract_strided_slice %4 {offsets = [0, 2], sizes = [8, 1], strides = [1, 1]} : vector<8x8xi32> to vector<8x1xi32>
    %36 = vector.broadcast %35 : vector<8x1xi32> to vector<8x128xi32>
    %37 = arith.cmpi eq, %36, %0 : vector<8x128xi32>
    %38 = arith.extui %37 : vector<8x128xi1> to vector<8x128xi32>
    %39 = arith.sitofp %38 : vector<8x128xi32> to vector<8x128xf32>
    %c0_22 = arith.constant 0 : index
    %c0_23 = arith.constant 0 : index
    %40 = vector.load %arg2[%c0_22, %c0_23] : memref<128x128xf32, #tpu.memory_space<vmem>>, vector<128x128xf32>
    %cst_24 = arith.constant dense<0.000000e+00> : vector<8x128xf32>
    %41 = tpu.matmul %39, %40, %cst_24 {dimension_numbers = #tpu.dot_dimension_numbers<[1], [0], [0], [1], [0, 0, 1, 1], [], []>} : vector<8x128xf32>, vector<128x128xf32>, vector<8x128xf32> -> vector<8x128xf32>
    %c0_25 = arith.constant 0 : index
    %c0_26 = arith.constant 0 : index
    %42 = vector.load %arg3[%c0_25, %c0_26] : memref<128x128xf32, #tpu.memory_space<vmem>>, vector<128x128xf32>
    %cst_27 = arith.constant dense<0.000000e+00> : vector<8x128xf32>
    %43 = tpu.matmul %41, %42, %cst_27 {dimension_numbers = #tpu.dot_dimension_numbers<[1], [0], [0], [1], [0, 0, 1, 1], [], []>} : vector<8x128xf32>, vector<128x128xf32>, vector<8x128xf32> -> vector<8x128xf32>
    %c0_28 = arith.constant 0 : index
    %c0_29 = arith.constant 0 : index
    %44 = vector.load %arg5[%c0_28, %c0_29] : memref<1x128xf32, #tpu.memory_space<vmem>>, vector<1x128xf32>
    %45 = vector.broadcast %44 : vector<1x128xf32> to vector<8x128xf32>
    %46 = arith.addf %43, %45 : vector<8x128xf32>
    %c2 = arith.constant 2 : index
    %c0_30 = arith.constant 0 : index
    %c0_31 = arith.constant 0 : index
    %47 = vector.load %arg9[%c2, %c0_30, %c0_31] : memref<8x8x128xf32, #tpu.memory_space<vmem>>, vector<1x8x128xf32>
    %48 = vector.shape_cast %47 : vector<1x8x128xf32> to vector<8x128xf32>
    %49 = vector.shape_cast %46 : vector<8x128xf32> to vector<1x8x128xf32>
    tpu.vector_store %arg9[%c2, %c0_30, %c0_31], %49 {strides = array<i32>} : memref<8x8x128xf32, #tpu.memory_space<vmem>>, vector<1x8x128xf32>,
    %50 = vector.extract_strided_slice %4 {offsets = [0, 3], sizes = [8, 1], strides = [1, 1]} : vector<8x8xi32> to vector<8x1xi32>
    %51 = vector.broadcast %50 : vector<8x1xi32> to vector<8x128xi32>
    %52 = arith.cmpi eq, %51, %0 : vector<8x128xi32>
    %53 = arith.extui %52 : vector<8x128xi1> to vector<8x128xi32>
    %54 = arith.sitofp %53 : vector<8x128xi32> to vector<8x128xf32>
    %c0_32 = arith.constant 0 : index
    %c0_33 = arith.constant 0 : index
    %55 = vector.load %arg2[%c0_32, %c0_33] : memref<128x128xf32, #tpu.memory_space<vmem>>, vector<128x128xf32>
    %cst_34 = arith.constant dense<0.000000e+00> : vector<8x128xf32>
    %56 = tpu.matmul %54, %55, %cst_34 {dimension_numbers = #tpu.dot_dimension_numbers<[1], [0], [0], [1], [0, 0, 1, 1], [], []>} : vector<8x128xf32>, vector<128x128xf32>, vector<8x128xf32> -> vector<8x128xf32>
    %c0_35 = arith.constant 0 : index
    %c0_36 = arith.constant 0 : index
    %57 = vector.load %arg3[%c0_35, %c0_36] : memref<128x128xf32, #tpu.memory_space<vmem>>, vector<128x128xf32>
    %cst_37 = arith.constant dense<0.000000e+00> : vector<8x128xf32>
    %58 = tpu.matmul %56, %57, %cst_37 {dimension_numbers = #tpu.dot_dimension_numbers<[1], [0], [0], [1], [0, 0, 1, 1], [], []>} : vector<8x128xf32>, vector<128x128xf32>, vector<8x128xf32> -> vector<8x128xf32>
    %c0_38 = arith.constant 0 : index
    %c0_39 = arith.constant 0 : index
    %59 = vector.load %arg5[%c0_38, %c0_39] : memref<1x128xf32, #tpu.memory_space<vmem>>, vector<1x128xf32>
    %60 = vector.broadcast %59 : vector<1x128xf32> to vector<8x128xf32>
    %61 = arith.addf %58, %60 : vector<8x128xf32>
    %c3 = arith.constant 3 : index
    %c0_40 = arith.constant 0 : index
    %c0_41 = arith.constant 0 : index
    %62 = vector.load %arg9[%c3, %c0_40, %c0_41] : memref<8x8x128xf32, #tpu.memory_space<vmem>>, vector<1x8x128xf32>
    %63 = vector.shape_cast %62 : vector<1x8x128xf32> to vector<8x128xf32>
    %64 = vector.shape_cast %61 : vector<8x128xf32> to vector<1x8x128xf32>
    tpu.vector_store %arg9[%c3, %c0_40, %c0_41], %64 {strides = array<i32>} : memref<8x8x128xf32, #tpu.memory_space<vmem>>, vector<1x8x128xf32>,
    %65 = vector.extract_strided_slice %4 {offsets = [0, 4], sizes = [8, 1], strides = [1, 1]} : vector<8x8xi32> to vector<8x1xi32>
    %66 = vector.broadcast %65 : vector<8x1xi32> to vector<8x128xi32>
    %67 = arith.cmpi eq, %66, %0 : vector<8x128xi32>
    %68 = arith.extui %67 : vector<8x128xi1> to vector<8x128xi32>
    %69 = arith.sitofp %68 : vector<8x128xi32> to vector<8x128xf32>
    %c0_42 = arith.constant 0 : index
    %c0_43 = arith.constant 0 : index
    %70 = vector.load %arg2[%c0_42, %c0_43] : memref<128x128xf32, #tpu.memory_space<vmem>>, vector<128x128xf32>
    %cst_44 = arith.constant dense<0.000000e+00> : vector<8x128xf32>
    %71 = tpu.matmul %69, %70, %cst_44 {dimension_numbers = #tpu.dot_dimension_numbers<[1], [0], [0], [1], [0, 0, 1, 1], [], []>} : vector<8x128xf32>, vector<128x128xf32>, vector<8x128xf32> -> vector<8x128xf32>
    %c0_45 = arith.constant 0 : index
    %c0_46 = arith.constant 0 : index
    %72 = vector.load %arg3[%c0_45, %c0_46] : memref<128x128xf32, #tpu.memory_space<vmem>>, vector<128x128xf32>
    %cst_47 = arith.constant dense<0.000000e+00> : vector<8x128xf32>
    %73 = tpu.matmul %71, %72, %cst_47 {dimension_numbers = #tpu.dot_dimension_numbers<[1], [0], [0], [1], [0, 0, 1, 1], [], []>} : vector<8x128xf32>, vector<128x128xf32>, vector<8x128xf32> -> vector<8x128xf32>
    %c0_48 = arith.constant 0 : index
    %c0_49 = arith.constant 0 : index
    %74 = vector.load %arg5[%c0_48, %c0_49] : memref<1x128xf32, #tpu.memory_space<vmem>>, vector<1x128xf32>
    %75 = vector.broadcast %74 : vector<1x128xf32> to vector<8x128xf32>
    %76 = arith.addf %73, %75 : vector<8x128xf32>
    %c4 = arith.constant 4 : index
    %c0_50 = arith.constant 0 : index
    %c0_51 = arith.constant 0 : index
    %77 = vector.load %arg9[%c4, %c0_50, %c0_51] : memref<8x8x128xf32, #tpu.memory_space<vmem>>, vector<1x8x128xf32>
    %78 = vector.shape_cast %77 : vector<1x8x128xf32> to vector<8x128xf32>
    %79 = vector.shape_cast %76 : vector<8x128xf32> to vector<1x8x128xf32>
    tpu.vector_store %arg9[%c4, %c0_50, %c0_51], %79 {strides = array<i32>} : memref<8x8x128xf32, #tpu.memory_space<vmem>>, vector<1x8x128xf32>,
    %80 = vector.extract_strided_slice %4 {offsets = [0, 5], sizes = [8, 1], strides = [1, 1]} : vector<8x8xi32> to vector<8x1xi32>
    %81 = vector.broadcast %80 : vector<8x1xi32> to vector<8x128xi32>
    %82 = arith.cmpi eq, %81, %0 : vector<8x128xi32>
    %83 = arith.extui %82 : vector<8x128xi1> to vector<8x128xi32>
    %84 = arith.sitofp %83 : vector<8x128xi32> to vector<8x128xf32>
    %c0_52 = arith.constant 0 : index
    %c0_53 = arith.constant 0 : index
    %85 = vector.load %arg2[%c0_52, %c0_53] : memref<128x128xf32, #tpu.memory_space<vmem>>, vector<128x128xf32>
    %cst_54 = arith.constant dense<0.000000e+00> : vector<8x128xf32>
    %86 = tpu.matmul %84, %85, %cst_54 {dimension_numbers = #tpu.dot_dimension_numbers<[1], [0], [0], [1], [0, 0, 1, 1], [], []>} : vector<8x128xf32>, vector<128x128xf32>, vector<8x128xf32> -> vector<8x128xf32>
    %c0_55 = arith.constant 0 : index
    %c0_56 = arith.constant 0 : index
    %87 = vector.load %arg3[%c0_55, %c0_56] : memref<128x128xf32, #tpu.memory_space<vmem>>, vector<128x128xf32>
    %cst_57 = arith.constant dense<0.000000e+00> : vector<8x128xf32>
    %88 = tpu.matmul %86, %87, %cst_57 {dimension_numbers = #tpu.dot_dimension_numbers<[1], [0], [0], [1], [0, 0, 1, 1], [], []>} : vector<8x128xf32>, vector<128x128xf32>, vector<8x128xf32> -> vector<8x128xf32>
    %c0_58 = arith.constant 0 : index
    %c0_59 = arith.constant 0 : index
    %89 = vector.load %arg5[%c0_58, %c0_59] : memref<1x128xf32, #tpu.memory_space<vmem>>, vector<1x128xf32>
    %90 = vector.broadcast %89 : vector<1x128xf32> to vector<8x128xf32>
    %91 = arith.addf %88, %90 : vector<8x128xf32>
    %c5 = arith.constant 5 : index
    %c0_60 = arith.constant 0 : index
    %c0_61 = arith.constant 0 : index
    %92 = vector.load %arg9[%c5, %c0_60, %c0_61] : memref<8x8x128xf32, #tpu.memory_space<vmem>>, vector<1x8x128xf32>
    %93 = vector.shape_cast %92 : vector<1x8x128xf32> to vector<8x128xf32>
    %94 = vector.shape_cast %91 : vector<8x128xf32> to vector<1x8x128xf32>
    tpu.vector_store %arg9[%c5, %c0_60, %c0_61], %94 {strides = array<i32>} : memref<8x8x128xf32, #tpu.memory_space<vmem>>, vector<1x8x128xf32>,
    %95 = vector.extract_strided_slice %4 {offsets = [0, 6], sizes = [8, 1], strides = [1, 1]} : vector<8x8xi32> to vector<8x1xi32>
    %96 = vector.broadcast %95 : vector<8x1xi32> to vector<8x128xi32>
    %97 = arith.cmpi eq, %96, %0 : vector<8x128xi32>
    %98 = arith.extui %97 : vector<8x128xi1> to vector<8x128xi32>
    %99 = arith.sitofp %98 : vector<8x128xi32> to vector<8x128xf32>
    %c0_62 = arith.constant 0 : index
    %c0_63 = arith.constant 0 : index
    %100 = vector.load %arg2[%c0_62, %c0_63] : memref<128x128xf32, #tpu.memory_space<vmem>>, vector<128x128xf32>
    %cst_64 = arith.constant dense<0.000000e+00> : vector<8x128xf32>
    %101 = tpu.matmul %99, %100, %cst_64 {dimension_numbers = #tpu.dot_dimension_numbers<[1], [0], [0], [1], [0, 0, 1, 1], [], []>} : vector<8x128xf32>, vector<128x128xf32>, vector<8x128xf32> -> vector<8x128xf32>
    %c0_65 = arith.constant 0 : index
    %c0_66 = arith.constant 0 : index
    %102 = vector.load %arg3[%c0_65, %c0_66] : memref<128x128xf32, #tpu.memory_space<vmem>>, vector<128x128xf32>
    %cst_67 = arith.constant dense<0.000000e+00> : vector<8x128xf32>
    %103 = tpu.matmul %101, %102, %cst_67 {dimension_numbers = #tpu.dot_dimension_numbers<[1], [0], [0], [1], [0, 0, 1, 1], [], []>} : vector<8x128xf32>, vector<128x128xf32>, vector<8x128xf32> -> vector<8x128xf32>
    %c0_68 = arith.constant 0 : index
    %c0_69 = arith.constant 0 : index
    %104 = vector.load %arg5[%c0_68, %c0_69] : memref<1x128xf32, #tpu.memory_space<vmem>>, vector<1x128xf32>
    %105 = vector.broadcast %104 : vector<1x128xf32> to vector<8x128xf32>
    %106 = arith.addf %103, %105 : vector<8x128xf32>
    %c6 = arith.constant 6 : index
    %c0_70 = arith.constant 0 : index
    %c0_71 = arith.constant 0 : index
    %107 = vector.load %arg9[%c6, %c0_70, %c0_71] : memref<8x8x128xf32, #tpu.memory_space<vmem>>, vector<1x8x128xf32>
    %108 = vector.shape_cast %107 : vector<1x8x128xf32> to vector<8x128xf32>
    %109 = vector.shape_cast %106 : vector<8x128xf32> to vector<1x8x128xf32>
    tpu.vector_store %arg9[%c6, %c0_70, %c0_71], %109 {strides = array<i32>} : memref<8x8x128xf32, #tpu.memory_space<vmem>>, vector<1x8x128xf32>,
    %110 = vector.extract_strided_slice %4 {offsets = [0, 7], sizes = [8, 1], strides = [1, 1]} : vector<8x8xi32> to vector<8x1xi32>
    %111 = vector.broadcast %110 : vector<8x1xi32> to vector<8x128xi32>
    %112 = arith.cmpi eq, %111, %0 : vector<8x128xi32>
    %113 = arith.extui %112 : vector<8x128xi1> to vector<8x128xi32>
    %114 = arith.sitofp %113 : vector<8x128xi32> to vector<8x128xf32>
    %c0_72 = arith.constant 0 : index
    %c0_73 = arith.constant 0 : index
    %115 = vector.load %arg2[%c0_72, %c0_73] : memref<128x128xf32, #tpu.memory_space<vmem>>, vector<128x128xf32>
    %cst_74 = arith.constant dense<0.000000e+00> : vector<8x128xf32>
    %116 = tpu.matmul %114, %115, %cst_74 {dimension_numbers = #tpu.dot_dimension_numbers<[1], [0], [0], [1], [0, 0, 1, 1], [], []>} : vector<8x128xf32>, vector<128x128xf32>, vector<8x128xf32> -> vector<8x128xf32>
    %c0_75 = arith.constant 0 : index
    %c0_76 = arith.constant 0 : index
    %117 = vector.load %arg3[%c0_75, %c0_76] : memref<128x128xf32, #tpu.memory_space<vmem>>, vector<128x128xf32>
    %cst_77 = arith.constant dense<0.000000e+00> : vector<8x128xf32>
    %118 = tpu.matmul %116, %117, %cst_77 {dimension_numbers = #tpu.dot_dimension_numbers<[1], [0], [0], [1], [0, 0, 1, 1], [], []>} : vector<8x128xf32>, vector<128x128xf32>, vector<8x128xf32> -> vector<8x128xf32>
    %c0_78 = arith.constant 0 : index
    %c0_79 = arith.constant 0 : index
    %119 = vector.load %arg5[%c0_78, %c0_79] : memref<1x128xf32, #tpu.memory_space<vmem>>, vector<1x128xf32>
    %120 = vector.broadcast %119 : vector<1x128xf32> to vector<8x128xf32>
    %121 = arith.addf %118, %120 : vector<8x128xf32>
    %c7 = arith.constant 7 : index
    %c0_80 = arith.constant 0 : index
    %c0_81 = arith.constant 0 : index
    %122 = vector.load %arg9[%c7, %c0_80, %c0_81] : memref<8x8x128xf32, #tpu.memory_space<vmem>>, vector<1x8x128xf32>
    %123 = vector.shape_cast %122 : vector<1x8x128xf32> to vector<8x128xf32>
    %124 = vector.shape_cast %121 : vector<8x128xf32> to vector<1x8x128xf32>
    tpu.vector_store %arg9[%c7, %c0_80, %c0_81], %124 {strides = array<i32>} : memref<8x8x128xf32, #tpu.memory_space<vmem>>, vector<1x8x128xf32>,
    %c0_i32_82 = arith.constant 0 : i32
    %125 = arith.index_cast %c0_i32_82 : i32 to index
    %c0_83 = arith.constant 0 : index
    %c0_84 = arith.constant 0 : index
    %126 = vector.load %arg9[%125, %c0_83, %c0_84] : memref<8x8x128xf32, #tpu.memory_space<vmem>>, vector<1x8x128xf32>
    %127 = vector.shape_cast %126 : vector<1x8x128xf32> to vector<8x128xf32>
    %c0_85 = arith.constant 0 : index
    %c0_86 = arith.constant 0 : index
    %128 = vector.load %arg4[%c0_85, %c0_86] : memref<128x128xf32, #tpu.memory_space<vmem>>, vector<128x128xf32>
    %cst_87 = arith.constant dense<0.000000e+00> : vector<8x128xf32>
    %129 = tpu.matmul %1, %128, %cst_87 {dimension_numbers = #tpu.dot_dimension_numbers<[1], [0], [0], [1], [0, 0, 1, 1], [], []>} : vector<8x128xf32>, vector<128x128xf32>, vector<8x128xf32> -> vector<8x128xf32>
    %130 = arith.addf %127, %129 : vector<8x128xf32>
    %131 = math.tanh %130 : vector<8x128xf32>
    %c1_i32 = arith.constant 1 : i32
    %132 = arith.index_cast %c1_i32 : i32 to index
    %c0_88 = arith.constant 0 : index
    %c0_89 = arith.constant 0 : index
    %133 = vector.load %arg9[%132, %c0_88, %c0_89] : memref<8x8x128xf32, #tpu.memory_space<vmem>>, vector<1x8x128xf32>
    %134 = vector.shape_cast %133 : vector<1x8x128xf32> to vector<8x128xf32>
    %c0_90 = arith.constant 0 : index
    %c0_91 = arith.constant 0 : index
    %135 = vector.load %arg4[%c0_90, %c0_91] : memref<128x128xf32, #tpu.memory_space<vmem>>, vector<128x128xf32>
    %cst_92 = arith.constant dense<0.000000e+00> : vector<8x128xf32>
    %136 = tpu.matmul %131, %135, %cst_92 {dimension_numbers = #tpu.dot_dimension_numbers<[1], [0], [0], [1], [0, 0, 1, 1], [], []>} : vector<8x128xf32>, vector<128x128xf32>, vector<8x128xf32> -> vector<8x128xf32>
    %137 = arith.addf %134, %136 : vector<8x128xf32>
    %138 = math.tanh %137 : vector<8x128xf32>
    %c2_i32 = arith.constant 2 : i32
    %139 = arith.index_cast %c2_i32 : i32 to index
    %c0_93 = arith.constant 0 : index
    %c0_94 = arith.constant 0 : index
    %140 = vector.load %arg9[%139, %c0_93, %c0_94] : memref<8x8x128xf32, #tpu.memory_space<vmem>>, vector<1x8x128xf32>
    %141 = vector.shape_cast %140 : vector<1x8x128xf32> to vector<8x128xf32>
    %c0_95 = arith.constant 0 : index
    %c0_96 = arith.constant 0 : index
    %142 = vector.load %arg4[%c0_95, %c0_96] : memref<128x128xf32, #tpu.memory_space<vmem>>, vector<128x128xf32>
    %cst_97 = arith.constant dense<0.000000e+00> : vector<8x128xf32>
    %143 = tpu.matmul %138, %142, %cst_97 {dimension_numbers = #tpu.dot_dimension_numbers<[1], [0], [0], [1], [0, 0, 1, 1], [], []>} : vector<8x128xf32>, vector<128x128xf32>, vector<8x128xf32> -> vector<8x128xf32>
    %144 = arith.addf %141, %143 : vector<8x128xf32>
    %145 = math.tanh %144 : vector<8x128xf32>
    %c3_i32 = arith.constant 3 : i32
    %146 = arith.index_cast %c3_i32 : i32 to index
    %c0_98 = arith.constant 0 : index
    %c0_99 = arith.constant 0 : index
    %147 = vector.load %arg9[%146, %c0_98, %c0_99] : memref<8x8x128xf32, #tpu.memory_space<vmem>>, vector<1x8x128xf32>
    %148 = vector.shape_cast %147 : vector<1x8x128xf32> to vector<8x128xf32>
    %c0_100 = arith.constant 0 : index
    %c0_101 = arith.constant 0 : index
    %149 = vector.load %arg4[%c0_100, %c0_101] : memref<128x128xf32, #tpu.memory_space<vmem>>, vector<128x128xf32>
    %cst_102 = arith.constant dense<0.000000e+00> : vector<8x128xf32>
    %150 = tpu.matmul %145, %149, %cst_102 {dimension_numbers = #tpu.dot_dimension_numbers<[1], [0], [0], [1], [0, 0, 1, 1], [], []>} : vector<8x128xf32>, vector<128x128xf32>, vector<8x128xf32> -> vector<8x128xf32>
    %151 = arith.addf %148, %150 : vector<8x128xf32>
    %152 = math.tanh %151 : vector<8x128xf32>
    %c4_i32 = arith.constant 4 : i32
    %153 = arith.index_cast %c4_i32 : i32 to index
    %c0_103 = arith.constant 0 : index
    %c0_104 = arith.constant 0 : index
    %154 = vector.load %arg9[%153, %c0_103, %c0_104] : memref<8x8x128xf32, #tpu.memory_space<vmem>>, vector<1x8x128xf32>
    %155 = vector.shape_cast %154 : vector<1x8x128xf32> to vector<8x128xf32>
    %c0_105 = arith.constant 0 : index
    %c0_106 = arith.constant 0 : index
    %156 = vector.load %arg4[%c0_105, %c0_106] : memref<128x128xf32, #tpu.memory_space<vmem>>, vector<128x128xf32>
    %cst_107 = arith.constant dense<0.000000e+00> : vector<8x128xf32>
    %157 = tpu.matmul %152, %156, %cst_107 {dimension_numbers = #tpu.dot_dimension_numbers<[1], [0], [0], [1], [0, 0, 1, 1], [], []>} : vector<8x128xf32>, vector<128x128xf32>, vector<8x128xf32> -> vector<8x128xf32>
    %158 = arith.addf %155, %157 : vector<8x128xf32>
    %159 = math.tanh %158 : vector<8x128xf32>
    %c5_i32 = arith.constant 5 : i32
    %160 = arith.index_cast %c5_i32 : i32 to index
    %c0_108 = arith.constant 0 : index
    %c0_109 = arith.constant 0 : index
    %161 = vector.load %arg9[%160, %c0_108, %c0_109] : memref<8x8x128xf32, #tpu.memory_space<vmem>>, vector<1x8x128xf32>
    %162 = vector.shape_cast %161 : vector<1x8x128xf32> to vector<8x128xf32>
    %c0_110 = arith.constant 0 : index
    %c0_111 = arith.constant 0 : index
    %163 = vector.load %arg4[%c0_110, %c0_111] : memref<128x128xf32, #tpu.memory_space<vmem>>, vector<128x128xf32>
    %cst_112 = arith.constant dense<0.000000e+00> : vector<8x128xf32>
    %164 = tpu.matmul %159, %163, %cst_112 {dimension_numbers = #tpu.dot_dimension_numbers<[1], [0], [0], [1], [0, 0, 1, 1], [], []>} : vector<8x128xf32>, vector<128x128xf32>, vector<8x128xf32> -> vector<8x128xf32>
    %165 = arith.addf %162, %164 : vector<8x128xf32>
    %166 = math.tanh %165 : vector<8x128xf32>
    %c6_i32 = arith.constant 6 : i32
    %167 = arith.index_cast %c6_i32 : i32 to index
    %c0_113 = arith.constant 0 : index
    %c0_114 = arith.constant 0 : index
    %168 = vector.load %arg9[%167, %c0_113, %c0_114] : memref<8x8x128xf32, #tpu.memory_space<vmem>>, vector<1x8x128xf32>
    %169 = vector.shape_cast %168 : vector<1x8x128xf32> to vector<8x128xf32>
    %c0_115 = arith.constant 0 : index
    %c0_116 = arith.constant 0 : index
    %170 = vector.load %arg4[%c0_115, %c0_116] : memref<128x128xf32, #tpu.memory_space<vmem>>, vector<128x128xf32>
    %cst_117 = arith.constant dense<0.000000e+00> : vector<8x128xf32>
    %171 = tpu.matmul %166, %170, %cst_117 {dimension_numbers = #tpu.dot_dimension_numbers<[1], [0], [0], [1], [0, 0, 1, 1], [], []>} : vector<8x128xf32>, vector<128x128xf32>, vector<8x128xf32> -> vector<8x128xf32>
    %172 = arith.addf %169, %171 : vector<8x128xf32>
    %173 = math.tanh %172 : vector<8x128xf32>
    %c7_i32 = arith.constant 7 : i32
    %174 = arith.index_cast %c7_i32 : i32 to index
    %c0_118 = arith.constant 0 : index
    %c0_119 = arith.constant 0 : index
    %175 = vector.load %arg9[%174, %c0_118, %c0_119] : memref<8x8x128xf32, #tpu.memory_space<vmem>>, vector<1x8x128xf32>
    %176 = vector.shape_cast %175 : vector<1x8x128xf32> to vector<8x128xf32>
    %c0_120 = arith.constant 0 : index
    %c0_121 = arith.constant 0 : index
    %177 = vector.load %arg4[%c0_120, %c0_121] : memref<128x128xf32, #tpu.memory_space<vmem>>, vector<128x128xf32>
    %cst_122 = arith.constant dense<0.000000e+00> : vector<8x128xf32>
    %178 = tpu.matmul %173, %177, %cst_122 {dimension_numbers = #tpu.dot_dimension_numbers<[1], [0], [0], [1], [0, 0, 1, 1], [], []>} : vector<8x128xf32>, vector<128x128xf32>, vector<8x128xf32> -> vector<8x128xf32>
    %179 = arith.addf %176, %178 : vector<8x128xf32>
    %180 = math.tanh %179 : vector<8x128xf32>
    %c8_i32 = arith.constant 8 : i32
    %c1_i32_123 = arith.constant 1 : i32
    %c0_124 = arith.constant 0 : index
    %c0_125 = arith.constant 0 : index
    %181 = vector.load %arg6[%c0_124, %c0_125] : memref<128x128xf32, #tpu.memory_space<vmem>>, vector<128x128xf32>
    %cst_126 = arith.constant dense<0.000000e+00> : vector<8x128xf32>
    %182 = tpu.matmul %180, %181, %cst_126 {dimension_numbers = #tpu.dot_dimension_numbers<[1], [0], [0], [1], [0, 0, 1, 1], [], []>} : vector<8x128xf32>, vector<128x128xf32>, vector<8x128xf32> -> vector<8x128xf32>
    %c0_127 = arith.constant 0 : index
    %c0_128 = arith.constant 0 : index
    %183 = vector.load %arg7[%c0_127, %c0_128] : memref<1x128xf32, #tpu.memory_space<vmem>>, vector<1x128xf32>
    %184 = vector.broadcast %183 : vector<1x128xf32> to vector<8x128xf32>
    %185 = arith.addf %182, %184 : vector<8x128xf32>
    %c0_129 = arith.constant 0 : index
    %c0_130 = arith.constant 0 : index
    %186 = vector.load %arg8[%c0_129, %c0_130] : memref<8x128xf32, #tpu.memory_space<vmem>>, vector<8x128xf32>
    tpu.vector_store %arg8[%c0_129, %c0_130], %185 {strides = array<i32>} : memref<8x128xf32, #tpu.memory_space<vmem>>, vector<8x128xf32>,
    return
  }
  func.func @transform_0(%arg0: i32) -> (i32, i32, i32) {
    %c0_i32 = arith.constant 0 : i32
    %c0_i32_0 = arith.constant 0 : i32
    %c0_i32_1 = arith.constant 0 : i32
    return %c0_i32, %arg0, %c0_i32_0 : i32, i32, i32
  }
  func.func @transform_1(%arg0: i32) -> (i32, i32) {
    %c0_i32 = arith.constant 0 : i32
    %c0_i32_0 = arith.constant 0 : i32
    %c0_i32_1 = arith.constant 0 : i32
    return %c0_i32, %c0_i32_0 : i32, i32
  }
  func.func @transform_2(%arg0: i32) -> (i32, i32) {
    %c0_i32 = arith.constant 0 : i32
    %c0_i32_0 = arith.constant 0 : i32
    %c0_i32_1 = arith.constant 0 : i32
    return %c0_i32, %c0_i32_0 : i32, i32
  }
  func.func @transform_3(%arg0: i32) -> (i32, i32) {
    %c0_i32 = arith.constant 0 : i32
    %c0_i32_0 = arith.constant 0 : i32
    %c0_i32_1 = arith.constant 0 : i32
    return %c0_i32, %c0_i32_0 : i32, i32
  }
  func.func @transform_4(%arg0: i32) -> (i32, i32) {
    %c0_i32 = arith.constant 0 : i32
    %c0_i32_0 = arith.constant 0 : i32
    %c0_i32_1 = arith.constant 0 : i32
    return %c0_i32, %c0_i32_0 : i32, i32
  }
  func.func @transform_5(%arg0: i32) -> (i32, i32) {
    %c0_i32 = arith.constant 0 : i32
    %c0_i32_0 = arith.constant 0 : i32
    %c0_i32_1 = arith.constant 0 : i32
    return %c0_i32, %c0_i32_0 : i32, i32
  }
  func.func @transform_6(%arg0: i32) -> (i32, i32) {
    %c0_i32 = arith.constant 0 : i32
    %c0_i32_0 = arith.constant 0 : i32
    %c0_i32_1 = arith.constant 0 : i32
    return %c0_i32, %c0_i32_0 : i32, i32
  }
  func.func @transform_7(%arg0: i32) -> (i32, i32) {
    %c0_i32 = arith.constant 0 : i32
    %c0_i32_0 = arith.constant 0 : i32
    return %arg0, %c0_i32 : i32, i32
  }
}

</mosaic_0001>

<llo_original>
// kernel: tpu_custom_call.1
$region0: #{tpu_custom_call.1}
  #allocation0 [shape = 'u32[]', space=smem, size = 0x4, offset = 0x4, fixed_abs, tag = 'smem constant byte address 0x4 - core index']
  #allocation1 [shape = 'u32[144,128]{1,0:T(1,128)}', space=vmem, size = 0x12000, scoped, tag = 'internal scratch']
  #allocation2 [shape = 'f32[8,8,128]{2,1,0:T(8,128)}', space=vmem, size = 0x8000, scoped, tag = 'scratch operand']
  %s0 = inlined_call_operand.hbm [shape: s32[1,8,8], index: 0, kind: input, shape index: {}]
  %s1 = inlined_call_operand.hbm [shape: f32[128,128], index: 1, kind: input, shape index: {}]
  %s2 = inlined_call_operand.hbm [shape: f32[128,128], index: 2, kind: input, shape index: {}]
  %s3 = inlined_call_operand.hbm [shape: f32[128,128], index: 3, kind: input, shape index: {}]
  %s4 = inlined_call_operand.vmem [shape: f32[1,128], index: 4, kind: input, shape index: {}]
  %s5 = inlined_call_operand.hbm [shape: f32[128,128], index: 5, kind: input, shape index: {}]
  %s6 = inlined_call_operand.vmem [shape: f32[1,128], index: 6, kind: input, shape index: {}]
  %s7 = inlined_call_operand.hbm [shape: f32[8,128], index: 7, kind: output, shape index: {}]
  %s8 = sld [smem:[#allocation0]]
  $region58: #{tpu_custom_call.1} parent=0
    _
  %s10 = ssub.s32 1, %s8
  %s11 = scalar_select 0, %s10, %s8
  $region1: #{tpu_custom_call.1} parent=0
    #allocation3 [shape = 'u8[4096]{0}', space=vmem, size = 0x1000, scoped, tag = 'input window, operand 0, single buffered']
    #allocation4 [shape = 's32[1]{0}', space=sflag, size = 0x4, scoped, tag = 'scoped memory for tpu_custom_call.1']
    #allocation5 [shape = 's32[1]{0}', space=sflag, size = 0x4, scoped, tag = 'scoped memory for tpu_custom_call.1']
    #allocation6 [shape = 'u8[65536]{0}', space=vmem, size = 0x10000, scoped, tag = 'input window, operand 1, single buffered']
    #allocation7 [shape = 's32[1]{0}', space=sflag, size = 0x4, scoped, tag = 'scoped memory for tpu_custom_call.1']
    #allocation8 [shape = 'u8[65536]{0}', space=vmem, size = 0x10000, scoped, tag = 'input window, operand 2, single buffered']
    #allocation9 [shape = 'u8[65536]{0}', space=vmem, size = 0x10000, scoped, tag = 'input window, operand 3, single buffered']
    #allocation10 [shape = 's32[1]{0}', space=sflag, size = 0x4, scoped, tag = 'scoped memory for tpu_custom_call.1']
    #allocation11 [shape = 'u8[65536]{0}', space=vmem, size = 0x10000, scoped, tag = 'input window, operand 5, single buffered']
    #allocation12 [shape = 'u8[4096]{0}', space=vmem, size = 0x1000, scoped, tag = 'output window, operand 0, single buffered']
    %12 = vsyncpa [#allocation4], 0
    %13 = vsyncpa [#allocation7], 0
    %14 = vsyncpa [#allocation10], 0
    %15 = vsyncpa [#allocation5], 0
    // Predicated region
    $region2: #{tpu_custom_call.1} parent=1 // pred_check
      _
    $region3: #{tpu_custom_call.1} parent=1 // pred_check_branch
      %17 = sbr.rel (0) target = $region5
    $region4: #{tpu_custom_call.1} parent=1 // pred_region
      %s19 = ssub.s32 128, 128
      %20 = vsyncadd [#allocation4], %s19
      %s22 = sshll.u32 [#allocation3], 4
      %s23 = int_to_ptr.vmem [resolvable:$true] %s22
      %25 = dma.hbm_to_vmem [thread:$0]  %s0, 128, %s23, [#allocation4]
    $region5: #{tpu_custom_call.1} parent=1 // pred_fallthru
      _
    // Predicated region
    $region6: #{tpu_custom_call.1} parent=1 // pred_check
      _
    $region7: #{tpu_custom_call.1} parent=1 // pred_check_branch
      %27 = sbr.rel (0) target = $region9
    $region8: #{tpu_custom_call.1} parent=1 // pred_region
      %s29 = ssub.s32 2048, 2048
      %30 = vsyncadd [#allocation7], %s29
      %s31 = sshll.u32 [#allocation6], 4
      %s32 = int_to_ptr.vmem [resolvable:$true] %s31
      %37 = dma.hbm_to_vmem [thread:$0]  %s1, 2048, %s32, [#allocation7], 128, 128, 8
    $region9: #{tpu_custom_call.1} parent=1 // pred_fallthru
      _
    // Predicated region
    $region10: #{tpu_custom_call.1} parent=1 // pred_check
      _
    $region11: #{tpu_custom_call.1} parent=1 // pred_check_branch
      %39 = sbr.rel (0) target = $region13
    $region12: #{tpu_custom_call.1} parent=1 // pred_region
      %s41 = ssub.s32 2048, 2048
      %42 = vsyncadd [#allocation7], %s41
      %s43 = sshll.u32 [#allocation8], 4
      %s44 = int_to_ptr.vmem [resolvable:$true] %s43
      %49 = dma.hbm_to_vmem [thread:$0]  %s2, 2048, %s44, [#allocation7], 128, 128, 8
    $region13: #{tpu_custom_call.1} parent=1 // pred_fallthru
      _
    // Predicated region
    $region14: #{tpu_custom_call.1} parent=1 // pred_check
      _
    $region15: #{tpu_custom_call.1} parent=1 // pred_check_branch
      %51 = sbr.rel (0) target = $region17
    $region16: #{tpu_custom_call.1} parent=1 // pred_region
      %s53 = ssub.s32 2048, 2048
      %54 = vsyncadd [#allocation10], %s53
      %s55 = sshll.u32 [#allocation9], 4
      %s56 = int_to_ptr.vmem [resolvable:$true] %s55
      %61 = dma.hbm_to_vmem [thread:$0]  %s3, 2048, %s56, [#allocation10], 128, 128, 8
    $region17: #{tpu_custom_call.1} parent=1 // pred_fallthru
      _
    // Predicated region
    $region18: #{tpu_custom_call.1} parent=1 // pred_check
      _
    $region19: #{tpu_custom_call.1} parent=1 // pred_check_branch
      %63 = sbr.rel (0) target = $region21
    $region20: #{tpu_custom_call.1} parent=1 // pred_region
      _
    $region21: #{tpu_custom_call.1} parent=1 // pred_fallthru
      _
    // Predicated region
    $region22: #{tpu_custom_call.1} parent=1 // pred_check
      _
    $region23: #{tpu_custom_call.1} parent=1 // pred_check_branch
      %65 = sbr.rel (0) target = $region25
    $region24: #{tpu_custom_call.1} parent=1 // pred_region
      %s67 = ssub.s32 2048, 2048
      %68 = vsyncadd [#allocation10], %s67
      %s69 = sshll.u32 [#allocation11], 4
      %s70 = int_to_ptr.vmem [resolvable:$true] %s69
      %75 = dma.hbm_to_vmem [thread:$0]  %s5, 2048, %s70, [#allocation10], 128, 128, 8
    $region25: #{tpu_custom_call.1} parent=1 // pred_fallthru
      _
    // Predicated region
    $region26: #{tpu_custom_call.1} parent=1 // pred_check
      _
    $region27: #{tpu_custom_call.1} parent=1 // pred_check_branch
      %77 = sbr.rel (0) target = $region29
    $region28: #{tpu_custom_call.1} parent=1 // pred_region
      _
    $region29: #{tpu_custom_call.1} parent=1 // pred_fallthru
      _
    // Predicated region
    $region30: #{tpu_custom_call.1} parent=1 // pred_check
      _
    $region31: #{tpu_custom_call.1} parent=1 // pred_check_branch
      %79 = sbr.rel (0) target = $region33
    $region32: #{tpu_custom_call.1} parent=1 // pred_region
      %80 = dma.done [#allocation4], 128
    $region33: #{tpu_custom_call.1} parent=1 // pred_fallthru
      _
    // Predicated region
    $region34: #{tpu_custom_call.1} parent=1 // pred_check
      _
    $region35: #{tpu_custom_call.1} parent=1 // pred_check_branch
      %82 = sbr.rel (0) target = $region37
    $region36: #{tpu_custom_call.1} parent=1 // pred_region
      %83 = dma.done [#allocation7], 2048
    $region37: #{tpu_custom_call.1} parent=1 // pred_fallthru
      _
    // Predicated region
    $region38: #{tpu_custom_call.1} parent=1 // pred_check
      _
    $region39: #{tpu_custom_call.1} parent=1 // pred_check_branch
      %85 = sbr.rel (0) target = $region41
    $region40: #{tpu_custom_call.1} parent=1 // pred_region
      %86 = dma.done [#allocation7], 2048
    $region41: #{tpu_custom_call.1} parent=1 // pred_fallthru
      _
    // Predicated region
    $region42: #{tpu_custom_call.1} parent=1 // pred_check
      _
    $region43: #{tpu_custom_call.1} parent=1 // pred_check_branch
      %88 = sbr.rel (0) target = $region45
    $region44: #{tpu_custom_call.1} parent=1 // pred_region
      %89 = dma.done [#allocation10], 2048
    $region45: #{tpu_custom_call.1} parent=1 // pred_fallthru
      _
    // Predicated region
    $region46: #{tpu_custom_call.1} parent=1 // pred_check
      _
    $region47: #{tpu_custom_call.1} parent=1 // pred_check_branch
      %91 = sbr.rel (0) target = $region49
    $region48: #{tpu_custom_call.1} parent=1 // pred_region
      %92 = dma.done [#allocation10], 2048
    $region49: #{tpu_custom_call.1} parent=1 // pred_fallthru
      _
    %v93 = vlaneseq
    %v94 = vand.u32 %v93, 127
    %v95 = vld [vmem:[#allocation3] sm:$0xff]
    %96 = vset.pattern.permute.xlu0 0
    %97 = vperm.xlu0 %96, %v95
    %v98 = vpop.permute.xlu0 %97
    %vm99 = vcmp.eq.s32.totalorder %v98, %v94
    %v100 = vsel %vm99, 1, 0
    %v101 = vcvt.s32.f32 %v100
    %v102 = vld [vmem:[#allocation6] sm:$0xff]
    %v103 = vld [vmem:[#allocation6 + $0x8] sm:$0xff]
    %v104 = vld [vmem:[#allocation6 + $0x10] sm:$0xff]
    %v105 = vld [vmem:[#allocation6 + $0x18] sm:$0xff]
    %v106 = vld [vmem:[#allocation6 + $0x20] sm:$0xff]
    %v107 = vld [vmem:[#allocation6 + $0x28] sm:$0xff]
    %v108 = vld [vmem:[#allocation6 + $0x30] sm:$0xff]
    %v109 = vld [vmem:[#allocation6 + $0x38] sm:$0xff]
    %v110 = vld [vmem:[#allocation6 + $0x40] sm:$0xff]
    %v111 = vld [vmem:[#allocation6 + $0x48] sm:$0xff]
    %v112 = vld [vmem:[#allocation6 + $0x50] sm:$0xff]
    %v113 = vld [vmem:[#allocation6 + $0x58] sm:$0xff]
    %v114 = vld [vmem:[#allocation6 + $0x60] sm:$0xff]
    %v115 = vld [vmem:[#allocation6 + $0x68] sm:$0xff]
    %v116 = vld [vmem:[#allocation6 + $0x70] sm:$0xff]
    %v117 = vld [vmem:[#allocation6 + $0x78] sm:$0xff]
    %118 = vmatprep.subr.mxu0 0.0
    %119 = vmatpush1.msra.mxu0 %v102
    %120 = vmatprep.subr.mxu0 0.0
    %121 = vmatpush1.msra.mxu0 %v103
    %122 = vmatprep.subr.mxu0 0.0
    %123 = vmatpush1.msra.mxu0 %v104
    %124 = vmatprep.subr.mxu0 0.0
    %125 = vmatpush1.msra.mxu0 %v105
    %126 = vmatprep.subr.mxu0 0.0
    %127 = vmatpush1.msra.mxu0 %v106
    %128 = vmatprep.subr.mxu0 0.0
    %129 = vmatpush1.msra.mxu0 %v107
    %130 = vmatprep.subr.mxu0 0.0
    %131 = vmatpush1.msra.mxu0 %v108
    %132 = vmatprep.subr.mxu0 0.0
    %133 = vmatpush1.msra.mxu0 %v109
    %134 = vmatprep.subr.mxu0 0.0
    %135 = vmatpush1.msra.mxu0 %v110
    %136 = vmatprep.subr.mxu0 0.0
    %137 = vmatpush1.msra.mxu0 %v111
    %138 = vmatprep.subr.mxu0 0.0
    %139 = vmatpush1.msra.mxu0 %v112
    %140 = vmatprep.subr.mxu0 0.0
    %141 = vmatpush1.msra.mxu0 %v113
    %142 = vmatprep.subr.mxu0 0.0
    %143 = vmatpush1.msra.mxu0 %v114
    %144 = vmatprep.subr.mxu0 0.0
    %145 = vmatpush1.msra.mxu0 %v115
    %146 = vmatprep.subr.mxu0 0.0
    %147 = vmatpush1.msra.mxu0 %v116
    %148 = vmatprep.subr.mxu0 0.0
    %149 = vmatpush1.msra.mxu0 %v117
    %150 = vmatprep.subr.mxu0 0.0
    %151 = vmatpush1.msra.mxu0 0.0
    %152 = vmatprep.subr.mxu0 0.0
    %153 = vmatpush1.msra.mxu0 0.0
    %154 = vmatprep.subr.mxu0 0.0
    %155 = vmatpush1.msra.mxu0 0.0
    %156 = vmatprep.subr.mxu0 0.0
    %157 = vmatpush1.msra.mxu0 0.0
    %158 = vmatprep.subr.mxu0 0.0
    %159 = vmatpush1.msra.mxu0 0.0
    %160 = vmatprep.subr.mxu0 0.0
    %161 = vmatpush1.msra.mxu0 0.0
    %162 = vmatprep.subr.mxu0 0.0
    %163 = vmatpush1.msra.mxu0 0.0
    %164 = vmatprep.subr.mxu0 0.0
    %165 = vmatpush1.msra.mxu0 0.0
    %166 = vmatprep.subr.mxu0 0.0
    %167 = vmatpush1.msra.mxu0 0.0
    %168 = vmatprep.subr.mxu0 0.0
    %169 = vmatpush1.msra.mxu0 0.0
    %170 = vmatprep.subr.mxu0 0.0
    %171 = vmatpush1.msra.mxu0 0.0
    %172 = vmatprep.subr.mxu0 0.0
    %173 = vmatpush1.msra.mxu0 0.0
    %174 = vmatprep.subr.mxu0 0.0
    %175 = vmatpush1.msra.mxu0 0.0
    %176 = vmatprep.subr.mxu0 0.0
    %177 = vmatpush1.msra.mxu0 0.0
    %178 = vmatprep.subr.mxu0 0.0
    %179 = vmatpush1.msra.mxu0 0.0
    %180 = vmatprep.subr.mxu0 0.0
    %181 = vmatpush1.msra.mxu0 0.0
    %182 = vmatprep.mubr.f32.mxu0 0.0
    %183 = vmatmul.mubr.f32.gmra.mrb[0].mxu0 %v101
    %v184 = vpop.f32.mrb[0].mxu0
    %v185 = vadd.f32 0.0, %v184
    %v186 = vpop.f32.mrb[0].mxu0
    %187 = vdwg.mxu0
    %v188 = vld [vmem:[#allocation8] sm:$0xff]
    %v189 = vld [vmem:[#allocation8 + $0x8] sm:$0xff]
    %v190 = vld [vmem:[#allocation8 + $0x10] sm:$0xff]
    %v191 = vld [vmem:[#allocation8 + $0x18] sm:$0xff]
    %v192 = vld [vmem:[#allocation8 + $0x20] sm:$0xff]
    %v193 = vld [vmem:[#allocation8 + $0x28] sm:$0xff]
    %v194 = vld [vmem:[#allocation8 + $0x30] sm:$0xff]
    %v195 = vld [vmem:[#allocation8 + $0x38] sm:$0xff]
    %v196 = vld [vmem:[#allocation8 + $0x40] sm:$0xff]
    %v197 = vld [vmem:[#allocation8 + $0x48] sm:$0xff]
    %v198 = vld [vmem:[#allocation8 + $0x50] sm:$0xff]
    %v199 = vld [vmem:[#allocation8 + $0x58] sm:$0xff]
    %v200 = vld [vmem:[#allocation8 + $0x60] sm:$0xff]
    %v201 = vld [vmem:[#allocation8 + $0x68] sm:$0xff]
    %v202 = vld [vmem:[#allocation8 + $0x70] sm:$0xff]
    %v203 = vld [vmem:[#allocation8 + $0x78] sm:$0xff]
    %v204 = vld [vmem:[%s4] sm:$0x1]
    %v206 = vlaneseq
    %v207 = vshrl.u32 %v206, 7
    %v208 = vsub.s32 0, %v207
    %v209 = vrot.slane %v204, %v208
    %211 = vmatprep.subr.mxu0 0.0
    %212 = vmatpush1.msra.mxu0 %v188
    %213 = vmatprep.subr.mxu0 0.0
    %214 = vmatpush1.msra.mxu0 %v189
    %215 = vmatprep.subr.mxu0 0.0
    %216 = vmatpush1.msra.mxu0 %v190
    %217 = vmatprep.subr.mxu0 0.0
    %218 = vmatpush1.msra.mxu0 %v191
    %219 = vmatprep.subr.mxu0 0.0
    %220 = vmatpush1.msra.mxu0 %v192
    %221 = vmatprep.subr.mxu0 0.0
    %222 = vmatpush1.msra.mxu0 %v193
    %223 = vmatprep.subr.mxu0 0.0
    %224 = vmatpush1.msra.mxu0 %v194
    %225 = vmatprep.subr.mxu0 0.0
    %226 = vmatpush1.msra.mxu0 %v195
    %227 = vmatprep.subr.mxu0 0.0
    %228 = vmatpush1.msra.mxu0 %v196
    %229 = vmatprep.subr.mxu0 0.0
    %230 = vmatpush1.msra.mxu0 %v197
    %231 = vmatprep.subr.mxu0 0.0
    %232 = vmatpush1.msra.mxu0 %v198
    %233 = vmatprep.subr.mxu0 0.0
    %234 = vmatpush1.msra.mxu0 %v199
    %235 = vmatprep.subr.mxu0 0.0
    %236 = vmatpush1.msra.mxu0 %v200
    %237 = vmatprep.subr.mxu0 0.0
    %238 = vmatpush1.msra.mxu0 %v201
    %239 = vmatprep.subr.mxu0 0.0
    %240 = vmatpush1.msra.mxu0 %v202
    %241 = vmatprep.subr.mxu0 0.0
    %242 = vmatpush1.msra.mxu0 %v203
    %243 = vmatprep.subr.mxu0 0.0
    %244 = vmatpush1.msra.mxu0 0.0
    %245 = vmatprep.subr.mxu0 0.0
    %246 = vmatpush1.msra.mxu0 0.0
    %247 = vmatprep.subr.mxu0 0.0
    %248 = vmatpush1.msra.mxu0 0.0
    %249 = vmatprep.subr.mxu0 0.0
    %250 = vmatpush1.msra.mxu0 0.0
    %251 = vmatprep.subr.mxu0 0.0
    %252 = vmatpush1.msra.mxu0 0.0
    %253 = vmatprep.subr.mxu0 0.0
    %254 = vmatpush1.msra.mxu0 0.0
    %255 = vmatprep.subr.mxu0 0.0
    %256 = vmatpush1.msra.mxu0 0.0
    %257 = vmatprep.subr.mxu0 0.0
    %258 = vmatpush1.msra.mxu0 0.0
    %259 = vmatprep.subr.mxu0 0.0
    %260 = vmatpush1.msra.mxu0 0.0
    %261 = vmatprep.subr.mxu0 0.0
    %262 = vmatpush1.msra.mxu0 0.0
    %263 = vmatprep.subr.mxu0 0.0
    %264 = vmatpush1.msra.mxu0 0.0
    %265 = vmatprep.subr.mxu0 0.0
    %266 = vmatpush1.msra.mxu0 0.0
    %267 = vmatprep.subr.mxu0 0.0
    %268 = vmatpush1.msra.mxu0 0.0
    %269 = vmatprep.subr.mxu0 0.0
    %270 = vmatpush1.msra.mxu0 0.0
    %271 = vmatprep.subr.mxu0 0.0
    %272 = vmatpush1.msra.mxu0 0.0
    %273 = vmatprep.subr.mxu0 0.0
    %274 = vmatpush1.msra.mxu0 0.0
    %275 = vmatprep.mubr.f32.mxu0 0.0
    %276 = vmatmul.mubr.f32.gmra.mrb[0].mxu0 %v185
    %v277 = vpop.f32.mrb[0].mxu0
    %v278 = vadd.f32 %v209, %v277
    %v279 = vpop.f32.mrb[0].mxu0
    %280 = vdwg.mxu0
    %281 = vst [vmem:[#allocation2] sm:$0xff] %v278
    %282 = vset.pattern.permute.xlu0 1
    %283 = vperm.xlu0 %282, %v95
    %v284 = vpop.permute.xlu0 %283
    %vm285 = vcmp.eq.s32.totalorder %v284, %v94
    %v286 = vsel %vm285, 1, 0
    %v287 = vcvt.s32.f32 %v286
    %v288 = vld [vmem:[#allocation6] sm:$0xff]
    %v289 = vld [vmem:[#allocation6 + $0x8] sm:$0xff]
    %v290 = vld [vmem:[#allocation6 + $0x10] sm:$0xff]
    %v291 = vld [vmem:[#allocation6 + $0x18] sm:$0xff]
    %v292 = vld [vmem:[#allocation6 + $0x20] sm:$0xff]
    %v293 = vld [vmem:[#allocation6 + $0x28] sm:$0xff]
    %v294 = vld [vmem:[#allocation6 + $0x30] sm:$0xff]
    %v295 = vld [vmem:[#allocation6 + $0x38] sm:$0xff]
    %v296 = vld [vmem:[#allocation6 + $0x40] sm:$0xff]
    %v297 = vld [vmem:[#allocation6 + $0x48] sm:$0xff]
    %v298 = vld [vmem:[#allocation6 + $0x50] sm:$0xff]
    %v299 = vld [vmem:[#allocation6 + $0x58] sm:$0xff]
    %v300 = vld [vmem:[#allocation6 + $0x60] sm:$0xff]
    %v301 = vld [vmem:[#allocation6 + $0x68] sm:$0xff]
    %v302 = vld [vmem:[#allocation6 + $0x70] sm:$0xff]
    %v303 = vld [vmem:[#allocation6 + $0x78] sm:$0xff]
    %304 = vmatprep.subr.mxu0 0.0
    %305 = vmatpush1.msra.mxu0 %v288
    %306 = vmatprep.subr.mxu0 0.0
    %307 = vmatpush1.msra.mxu0 %v289
    %308 = vmatprep.subr.mxu0 0.0
    %309 = vmatpush1.msra.mxu0 %v290
    %310 = vmatprep.subr.mxu0 0.0
    %311 = vmatpush1.msra.mxu0 %v291
    %312 = vmatprep.subr.mxu0 0.0
    %313 = vmatpush1.msra.mxu0 %v292
    %314 = vmatprep.subr.mxu0 0.0
    %315 = vmatpush1.msra.mxu0 %v293
    %316 = vmatprep.subr.mxu0 0.0
    %317 = vmatpush1.msra.mxu0 %v294
    %318 = vmatprep.subr.mxu0 0.0
    %319 = vmatpush1.msra.mxu0 %v295
    %320 = vmatprep.subr.mxu0 0.0
    %321 = vmatpush1.msra.mxu0 %v296
    %322 = vmatprep.subr.mxu0 0.0
    %323 = vmatpush1.msra.mxu0 %v297
    %324 = vmatprep.subr.mxu0 0.0
    %325 = vmatpush1.msra.mxu0 %v298
    %326 = vmatprep.subr.mxu0 0.0
    %327 = vmatpush1.msra.mxu0 %v299
    %328 = vmatprep.subr.mxu0 0.0
    %329 = vmatpush1.msra.mxu0 %v300
    %330 = vmatprep.subr.mxu0 0.0
    %331 = vmatpush1.msra.mxu0 %v301
    %332 = vmatprep.subr.mxu0 0.0
    %333 = vmatpush1.msra.mxu0 %v302
    %334 = vmatprep.subr.mxu0 0.0
    %335 = vmatpush1.msra.mxu0 %v303
    %336 = vmatprep.subr.mxu0 0.0
    %337 = vmatpush1.msra.mxu0 0.0
    %338 = vmatprep.subr.mxu0 0.0
    %339 = vmatpush1.msra.mxu0 0.0
    %340 = vmatprep.subr.mxu0 0.0
    %341 = vmatpush1.msra.mxu0 0.0
    %342 = vmatprep.subr.mxu0 0.0
    %343 = vmatpush1.msra.mxu0 0.0
    %344 = vmatprep.subr.mxu0 0.0
    %345 = vmatpush1.msra.mxu0 0.0
    %346 = vmatprep.subr.mxu0 0.0
    %347 = vmatpush1.msra.mxu0 0.0
    %348 = vmatprep.subr.mxu0 0.0
    %349 = vmatpush1.msra.mxu0 0.0
    %350 = vmatprep.subr.mxu0 0.0
    %351 = vmatpush1.msra.mxu0 0.0
    %352 = vmatprep.subr.mxu0 0.0
    %353 = vmatpush1.msra.mxu0 0.0
    %354 = vmatprep.subr.mxu0 0.0
    %355 = vmatpush1.msra.mxu0 0.0
    %356 = vmatprep.subr.mxu0 0.0
    %357 = vmatpush1.msra.mxu0 0.0
    %358 = vmatprep.subr.mxu0 0.0
    %359 = vmatpush1.msra.mxu0 0.0
    %360 = vmatprep.subr.mxu0 0.0
    %361 = vmatpush1.msra.mxu0 0.0
    %362 = vmatprep.subr.mxu0 0.0
    %363 = vmatpush1.msra.mxu0 0.0
    %364 = vmatprep.subr.mxu0 0.0
    %365 = vmatpush1.msra.mxu0 0.0
    %366 = vmatprep.subr.mxu0 0.0
    %367 = vmatpush1.msra.mxu0 0.0
    %368 = vmatprep.mubr.f32.mxu0 0.0
    %369 = vmatmul.mubr.f32.gmra.mrb[0].mxu0 %v287
    %v370 = vpop.f32.mrb[0].mxu0
    %v371 = vadd.f32 0.0, %v370
    %v372 = vpop.f32.mrb[0].mxu0
    %373 = vdwg.mxu0
    %v374 = vld [vmem:[#allocation8] sm:$0xff]
    %v375 = vld [vmem:[#allocation8 + $0x8] sm:$0xff]
    %v376 = vld [vmem:[#allocation8 + $0x10] sm:$0xff]
    %v377 = vld [vmem:[#allocation8 + $0x18] sm:$0xff]
    %v378 = vld [vmem:[#allocation8 + $0x20] sm:$0xff]
    %v379 = vld [vmem:[#allocation8 + $0x28] sm:$0xff]
    %v380 = vld [vmem:[#allocation8 + $0x30] sm:$0xff]
    %v381 = vld [vmem:[#allocation8 + $0x38] sm:$0xff]
    %v382 = vld [vmem:[#allocation8 + $0x40] sm:$0xff]
    %v383 = vld [vmem:[#allocation8 + $0x48] sm:$0xff]
    %v384 = vld [vmem:[#allocation8 + $0x50] sm:$0xff]
    %v385 = vld [vmem:[#allocation8 + $0x58] sm:$0xff]
    %v386 = vld [vmem:[#allocation8 + $0x60] sm:$0xff]
    %v387 = vld [vmem:[#allocation8 + $0x68] sm:$0xff]
    %v388 = vld [vmem:[#allocation8 + $0x70] sm:$0xff]
    %v389 = vld [vmem:[#allocation8 + $0x78] sm:$0xff]
    %v390 = vld [vmem:[%s4] sm:$0x1]
    %v392 = vlaneseq
    %v393 = vshrl.u32 %v392, 7
    %v394 = vsub.s32 0, %v393
    %v395 = vrot.slane %v390, %v394
    %397 = vmatprep.subr.mxu0 0.0
    %398 = vmatpush1.msra.mxu0 %v374
    %399 = vmatprep.subr.mxu0 0.0
    %400 = vmatpush1.msra.mxu0 %v375
    %401 = vmatprep.subr.mxu0 0.0
    %402 = vmatpush1.msra.mxu0 %v376
    %403 = vmatprep.subr.mxu0 0.0
    %404 = vmatpush1.msra.mxu0 %v377
    %405 = vmatprep.subr.mxu0 0.0
    %406 = vmatpush1.msra.mxu0 %v378
    %407 = vmatprep.subr.mxu0 0.0
    %408 = vmatpush1.msra.mxu0 %v379
    %409 = vmatprep.subr.mxu0 0.0
    %410 = vmatpush1.msra.mxu0 %v380
    %411 = vmatprep.subr.mxu0 0.0
    %412 = vmatpush1.msra.mxu0 %v381
    %413 = vmatprep.subr.mxu0 0.0
    %414 = vmatpush1.msra.mxu0 %v382
    %415 = vmatprep.subr.mxu0 0.0
    %416 = vmatpush1.msra.mxu0 %v383
    %417 = vmatprep.subr.mxu0 0.0
    %418 = vmatpush1.msra.mxu0 %v384
    %419 = vmatprep.subr.mxu0 0.0
    %420 = vmatpush1.msra.mxu0 %v385
    %421 = vmatprep.subr.mxu0 0.0
    %422 = vmatpush1.msra.mxu0 %v386
    %423 = vmatprep.subr.mxu0 0.0
    %424 = vmatpush1.msra.mxu0 %v387
    %425 = vmatprep.subr.mxu0 0.0
    %426 = vmatpush1.msra.mxu0 %v388
    %427 = vmatprep.subr.mxu0 0.0
    %428 = vmatpush1.msra.mxu0 %v389
    %429 = vmatprep.subr.mxu0 0.0
    %430 = vmatpush1.msra.mxu0 0.0
    %431 = vmatprep.subr.mxu0 0.0
    %432 = vmatpush1.msra.mxu0 0.0
    %433 = vmatprep.subr.mxu0 0.0
    %434 = vmatpush1.msra.mxu0 0.0
    %435 = vmatprep.subr.mxu0 0.0
    %436 = vmatpush1.msra.mxu0 0.0
    %437 = vmatprep.subr.mxu0 0.0
    %438 = vmatpush1.msra.mxu0 0.0
    %439 = vmatprep.subr.mxu0 0.0
    %440 = vmatpush1.msra.mxu0 0.0
    %441 = vmatprep.subr.mxu0 0.0
    %442 = vmatpush1.msra.mxu0 0.0
    %443 = vmatprep.subr.mxu0 0.0
    %444 = vmatpush1.msra.mxu0 0.0
    %445 = vmatprep.subr.mxu0 0.0
    %446 = vmatpush1.msra.mxu0 0.0
    %447 = vmatprep.subr.mxu0 0.0
    %448 = vmatpush1.msra.mxu0 0.0
    %449 = vmatprep.subr.mxu0 0.0
    %450 = vmatpush1.msra.mxu0 0.0
    %451 = vmatprep.subr.mxu0 0.0
    %452 = vmatpush1.msra.mxu0 0.0
    %453 = vmatprep.subr.mxu0 0.0
    %454 = vmatpush1.msra.mxu0 0.0
    %455 = vmatprep.subr.mxu0 0.0
    %456 = vmatpush1.msra.mxu0 0.0
    %457 = vmatprep.subr.mxu0 0.0
    %458 = vmatpush1.msra.mxu0 0.0
    %459 = vmatprep.subr.mxu0 0.0
    %460 = vmatpush1.msra.mxu0 0.0
    %461 = vmatprep.mubr.f32.mxu0 0.0
    %462 = vmatmul.mubr.f32.gmra.mrb[0].mxu0 %v371
    %v463 = vpop.f32.mrb[0].mxu0
    %v464 = vadd.f32 %v395, %v463
    %v465 = vpop.f32.mrb[0].mxu0
    %466 = vdwg.mxu0
    %s467 = scalar_lea.vmem [#allocation2], 8
    %468 = vst [vmem:[%s467] sm:$0xff] %v464
    %469 = vset.pattern.permute.xlu0 2
    %470 = vperm.xlu0 %469, %v95
    %v471 = vpop.permute.xlu0 %470
    %vm472 = vcmp.eq.s32.totalorder %v471, %v94
    %v473 = vsel %vm472, 1, 0
    %v474 = vcvt.s32.f32 %v473
    %v475 = vld [vmem:[#allocation6] sm:$0xff]
    %v476 = vld [vmem:[#allocation6 + $0x8] sm:$0xff]
    %v477 = vld [vmem:[#allocation6 + $0x10] sm:$0xff]
    %v478 = vld [vmem:[#allocation6 + $0x18] sm:$0xff]
    %v479 = vld [vmem:[#allocation6 + $0x20] sm:$0xff]
    %v480 = vld [vmem:[#allocation6 + $0x28] sm:$0xff]
    %v481 = vld [vmem:[#allocation6 + $0x30] sm:$0xff]
    %v482 = vld [vmem:[#allocation6 + $0x38] sm:$0xff]
    %v483 = vld [vmem:[#allocation6 + $0x40] sm:$0xff]
    %v484 = vld [vmem:[#allocation6 + $0x48] sm:$0xff]
    %v485 = vld [vmem:[#allocation6 + $0x50] sm:$0xff]
    %v486 = vld [vmem:[#allocation6 + $0x58] sm:$0xff]
    %v487 = vld [vmem:[#allocation6 + $0x60] sm:$0xff]
    %v488 = vld [vmem:[#allocation6 + $0x68] sm:$0xff]
    %v489 = vld [vmem:[#allocation6 + $0x70] sm:$0xff]
    %v490 = vld [vmem:[#allocation6 + $0x78] sm:$0xff]
    %491 = vmatprep.subr.mxu0 0.0
    %492 = vmatpush1.msra.mxu0 %v475
    %493 = vmatprep.subr.mxu0 0.0
    %494 = vmatpush1.msra.mxu0 %v476
    %495 = vmatprep.subr.mxu0 0.0
    %496 = vmatpush1.msra.mxu0 %v477
    %497 = vmatprep.subr.mxu0 0.0
    %498 = vmatpush1.msra.mxu0 %v478
    %499 = vmatprep.subr.mxu0 0.0
    %500 = vmatpush1.msra.mxu0 %v479
    %501 = vmatprep.subr.mxu0 0.0
    %502 = vmatpush1.msra.mxu0 %v480
    %503 = vmatprep.subr.mxu0 0.0
    %504 = vmatpush1.msra.mxu0 %v481
    %505 = vmatprep.subr.mxu0 0.0
    %506 = vmatpush1.msra.mxu0 %v482
    %507 = vmatprep.subr.mxu0 0.0
    %508 = vmatpush1.msra.mxu0 %v483
    %509 = vmatprep.subr.mxu0 0.0
    %510 = vmatpush1.msra.mxu0 %v484
    %511 = vmatprep.subr.mxu0 0.0
    %512 = vmatpush1.msra.mxu0 %v485
    %513 = vmatprep.subr.mxu0 0.0
    %514 = vmatpush1.msra.mxu0 %v486
    %515 = vmatprep.subr.mxu0 0.0
    %516 = vmatpush1.msra.mxu0 %v487
    %517 = vmatprep.subr.mxu0 0.0
    %518 = vmatpush1.msra.mxu0 %v488
    %519 = vmatprep.subr.mxu0 0.0
    %520 = vmatpush1.msra.mxu0 %v489
    %521 = vmatprep.subr.mxu0 0.0
    %522 = vmatpush1.msra.mxu0 %v490
    %523 = vmatprep.subr.mxu0 0.0
    %524 = vmatpush1.msra.mxu0 0.0
    %525 = vmatprep.subr.mxu0 0.0
    %526 = vmatpush1.msra.mxu0 0.0
    %527 = vmatprep.subr.mxu0 0.0
    %528 = vmatpush1.msra.mxu0 0.0
    %529 = vmatprep.subr.mxu0 0.0
    %530 = vmatpush1.msra.mxu0 0.0
    %531 = vmatprep.subr.mxu0 0.0
    %532 = vmatpush1.msra.mxu0 0.0
    %533 = vmatprep.subr.mxu0 0.0
    %534 = vmatpush1.msra.mxu0 0.0
    %535 = vmatprep.subr.mxu0 0.0
    %536 = vmatpush1.msra.mxu0 0.0
    %537 = vmatprep.subr.mxu0 0.0
    %538 = vmatpush1.msra.mxu0 0.0
    %539 = vmatprep.subr.mxu0 0.0
    %540 = vmatpush1.msra.mxu0 0.0
    %541 = vmatprep.subr.mxu0 0.0
    %542 = vmatpush1.msra.mxu0 0.0
    %543 = vmatprep.subr.mxu0 0.0
    %544 = vmatpush1.msra.mxu0 0.0
    %545 = vmatprep.subr.mxu0 0.0
    %546 = vmatpush1.msra.mxu0 0.0
    %547 = vmatprep.subr.mxu0 0.0
    %548 = vmatpush1.msra.mxu0 0.0
    %549 = vmatprep.subr.mxu0 0.0
    %550 = vmatpush1.msra.mxu0 0.0
    %551 = vmatprep.subr.mxu0 0.0
    %552 = vmatpush1.msra.mxu0 0.0
    %553 = vmatprep.subr.mxu0 0.0
    %554 = vmatpush1.msra.mxu0 0.0
    %555 = vmatprep.mubr.f32.mxu0 0.0
    %556 = vmatmul.mubr.f32.gmra.mrb[0].mxu0 %v474
    %v557 = vpop.f32.mrb[0].mxu0
    %v558 = vadd.f32 0.0, %v557
    %v559 = vpop.f32.mrb[0].mxu0
    %560 = vdwg.mxu0
    %v561 = vld [vmem:[#allocation8] sm:$0xff]
    %v562 = vld [vmem:[#allocation8 + $0x8] sm:$0xff]
    %v563 = vld [vmem:[#allocation8 + $0x10] sm:$0xff]
    %v564 = vld [vmem:[#allocation8 + $0x18] sm:$0xff]
    %v565 = vld [vmem:[#allocation8 + $0x20] sm:$0xff]
    %v566 = vld [vmem:[#allocation8 + $0x28] sm:$0xff]
    %v567 = vld [vmem:[#allocation8 + $0x30] sm:$0xff]
    %v568 = vld [vmem:[#allocation8 + $0x38] sm:$0xff]
    %v569 = vld [vmem:[#allocation8 + $0x40] sm:$0xff]
    %v570 = vld [vmem:[#allocation8 + $0x48] sm:$0xff]
    %v571 = vld [vmem:[#allocation8 + $0x50] sm:$0xff]
    %v572 = vld [vmem:[#allocation8 + $0x58] sm:$0xff]
    %v573 = vld [vmem:[#allocation8 + $0x60] sm:$0xff]
    %v574 = vld [vmem:[#allocation8 + $0x68] sm:$0xff]
    %v575 = vld [vmem:[#allocation8 + $0x70] sm:$0xff]
    %v576 = vld [vmem:[#allocation8 + $0x78] sm:$0xff]
    %v577 = vld [vmem:[%s4] sm:$0x1]
    %v579 = vlaneseq
    %v580 = vshrl.u32 %v579, 7
    %v581 = vsub.s32 0, %v580
    %v582 = vrot.slane %v577, %v581
    %584 = vmatprep.subr.mxu0 0.0
    %585 = vmatpush1.msra.mxu0 %v561
    %586 = vmatprep.subr.mxu0 0.0
    %587 = vmatpush1.msra.mxu0 %v562
    %588 = vmatprep.subr.mxu0 0.0
    %589 = vmatpush1.msra.mxu0 %v563
    %590 = vmatprep.subr.mxu0 0.0
    %591 = vmatpush1.msra.mxu0 %v564
    %592 = vmatprep.subr.mxu0 0.0
    %593 = vmatpush1.msra.mxu0 %v565
    %594 = vmatprep.subr.mxu0 0.0
    %595 = vmatpush1.msra.mxu0 %v566
    %596 = vmatprep.subr.mxu0 0.0
    %597 = vmatpush1.msra.mxu0 %v567
    %598 = vmatprep.subr.mxu0 0.0
    %599 = vmatpush1.msra.mxu0 %v568
    %600 = vmatprep.subr.mxu0 0.0
    %601 = vmatpush1.msra.mxu0 %v569
    %602 = vmatprep.subr.mxu0 0.0
    %603 = vmatpush1.msra.mxu0 %v570
    %604 = vmatprep.subr.mxu0 0.0
    %605 = vmatpush1.msra.mxu0 %v571
    %606 = vmatprep.subr.mxu0 0.0
    %607 = vmatpush1.msra.mxu0 %v572
    %608 = vmatprep.subr.mxu0 0.0
    %609 = vmatpush1.msra.mxu0 %v573
    %610 = vmatprep.subr.mxu0 0.0
    %611 = vmatpush1.msra.mxu0 %v574
    %612 = vmatprep.subr.mxu0 0.0
    %613 = vmatpush1.msra.mxu0 %v575
    %614 = vmatprep.subr.mxu0 0.0
    %615 = vmatpush1.msra.mxu0 %v576
    %616 = vmatprep.subr.mxu0 0.0
    %617 = vmatpush1.msra.mxu0 0.0
    %618 = vmatprep.subr.mxu0 0.0
    %619 = vmatpush1.msra.mxu0 0.0
    %620 = vmatprep.subr.mxu0 0.0
    %621 = vmatpush1.msra.mxu0 0.0
    %622 = vmatprep.subr.mxu0 0.0
    %623 = vmatpush1.msra.mxu0 0.0
    %624 = vmatprep.subr.mxu0 0.0
    %625 = vmatpush1.msra.mxu0 0.0
    %626 = vmatprep.subr.mxu0 0.0
    %627 = vmatpush1.msra.mxu0 0.0
    %628 = vmatprep.subr.mxu0 0.0
    %629 = vmatpush1.msra.mxu0 0.0
    %630 = vmatprep.subr.mxu0 0.0
    %631 = vmatpush1.msra.mxu0 0.0
    %632 = vmatprep.subr.mxu0 0.0
    %633 = vmatpush1.msra.mxu0 0.0
    %634 = vmatprep.subr.mxu0 0.0
    %635 = vmatpush1.msra.mxu0 0.0
    %636 = vmatprep.subr.mxu0 0.0
    %637 = vmatpush1.msra.mxu0 0.0
    %638 = vmatprep.subr.mxu0 0.0
    %639 = vmatpush1.msra.mxu0 0.0
    %640 = vmatprep.subr.mxu0 0.0
    %641 = vmatpush1.msra.mxu0 0.0
    %642 = vmatprep.subr.mxu0 0.0
    %643 = vmatpush1.msra.mxu0 0.0
    %644 = vmatprep.subr.mxu0 0.0
    %645 = vmatpush1.msra.mxu0 0.0
    %646 = vmatprep.subr.mxu0 0.0
    %647 = vmatpush1.msra.mxu0 0.0
    %648 = vmatprep.mubr.f32.mxu0 0.0
    %649 = vmatmul.mubr.f32.gmra.mrb[0].mxu0 %v558
    %v650 = vpop.f32.mrb[0].mxu0
    %v651 = vadd.f32 %v582, %v650
    %v652 = vpop.f32.mrb[0].mxu0
    %653 = vdwg.mxu0
    %s654 = scalar_lea.vmem [#allocation2], 16
    %655 = vst [vmem:[%s654] sm:$0xff] %v651
    %656 = vset.pattern.permute.xlu0 3
    %657 = vperm.xlu0 %656, %v95
    %v658 = vpop.permute.xlu0 %657
    %vm659 = vcmp.eq.s32.totalorder %v658, %v94
    %v660 = vsel %vm659, 1, 0
    %v661 = vcvt.s32.f32 %v660
    %v662 = vld [vmem:[#allocation6] sm:$0xff]
    %v663 = vld [vmem:[#allocation6 + $0x8] sm:$0xff]
    %v664 = vld [vmem:[#allocation6 + $0x10] sm:$0xff]
    %v665 = vld [vmem:[#allocation6 + $0x18] sm:$0xff]
    %v666 = vld [vmem:[#allocation6 + $0x20] sm:$0xff]
    %v667 = vld [vmem:[#allocation6 + $0x28] sm:$0xff]
    %v668 = vld [vmem:[#allocation6 + $0x30] sm:$0xff]
    %v669 = vld [vmem:[#allocation6 + $0x38] sm:$0xff]
    %v670 = vld [vmem:[#allocation6 + $0x40] sm:$0xff]
    %v671 = vld [vmem:[#allocation6 + $0x48] sm:$0xff]
    %v672 = vld [vmem:[#allocation6 + $0x50] sm:$0xff]
    %v673 = vld [vmem:[#allocation6 + $0x58] sm:$0xff]
    %v674 = vld [vmem:[#allocation6 + $0x60] sm:$0xff]
    %v675 = vld [vmem:[#allocation6 + $0x68] sm:$0xff]
    %v676 = vld [vmem:[#allocation6 + $0x70] sm:$0xff]
    %v677 = vld [vmem:[#allocation6 + $0x78] sm:$0xff]
    %678 = vmatprep.subr.mxu0 0.0
    %679 = vmatpush1.msra.mxu0 %v662
    %680 = vmatprep.subr.mxu0 0.0
    %681 = vmatpush1.msra.mxu0 %v663
    %682 = vmatprep.subr.mxu0 0.0
    %683 = vmatpush1.msra.mxu0 %v664
    %684 = vmatprep.subr.mxu0 0.0
    %685 = vmatpush1.msra.mxu0 %v665
    %686 = vmatprep.subr.mxu0 0.0
    %687 = vmatpush1.msra.mxu0 %v666
    %688 = vmatprep.subr.mxu0 0.0
    %689 = vmatpush1.msra.mxu0 %v667
    %690 = vmatprep.subr.mxu0 0.0
    %691 = vmatpush1.msra.mxu0 %v668
    %692 = vmatprep.subr.mxu0 0.0
    %693 = vmatpush1.msra.mxu0 %v669
    %694 = vmatprep.subr.mxu0 0.0
    %695 = vmatpush1.msra.mxu0 %v670
    %696 = vmatprep.subr.mxu0 0.0
    %697 = vmatpush1.msra.mxu0 %v671
    %698 = vmatprep.subr.mxu0 0.0
    %699 = vmatpush1.msra.mxu0 %v672
    %700 = vmatprep.subr.mxu0 0.0
    %701 = vmatpush1.msra.mxu0 %v673
    %702 = vmatprep.subr.mxu0 0.0
    %703 = vmatpush1.msra.mxu0 %v674
    %704 = vmatprep.subr.mxu0 0.0
    %705 = vmatpush1.msra.mxu0 %v675
    %706 = vmatprep.subr.mxu0 0.0
    %707 = vmatpush1.msra.mxu0 %v676
    %708 = vmatprep.subr.mxu0 0.0
    %709 = vmatpush1.msra.mxu0 %v677
    %710 = vmatprep.subr.mxu0 0.0
    %711 = vmatpush1.msra.mxu0 0.0
    %712 = vmatprep.subr.mxu0 0.0
    %713 = vmatpush1.msra.mxu0 0.0
    %714 = vmatprep.subr.mxu0 0.0
    %715 = vmatpush1.msra.mxu0 0.0
    %716 = vmatprep.subr.mxu0 0.0
    %717 = vmatpush1.msra.mxu0 0.0
    %718 = vmatprep.subr.mxu0 0.0
    %719 = vmatpush1.msra.mxu0 0.0
    %720 = vmatprep.subr.mxu0 0.0
    %721 = vmatpush1.msra.mxu0 0.0
    %722 = vmatprep.subr.mxu0 0.0
    %723 = vmatpush1.msra.mxu0 0.0
    %724 = vmatprep.subr.mxu0 0.0
    %725 = vmatpush1.msra.mxu0 0.0
    %726 = vmatprep.subr.mxu0 0.0
    %727 = vmatpush1.msra.mxu0 0.0
    %728 = vmatprep.subr.mxu0 0.0
    %729 = vmatpush1.msra.mxu0 0.0
    %730 = vmatprep.subr.mxu0 0.0
    %731 = vmatpush1.msra.mxu0 0.0
    %732 = vmatprep.subr.mxu0 0.0
    %733 = vmatpush1.msra.mxu0 0.0
    %734 = vmatprep.subr.mxu0 0.0
    %735 = vmatpush1.msra.mxu0 0.0
    %736 = vmatprep.subr.mxu0 0.0
    %737 = vmatpush1.msra.mxu0 0.0
    %738 = vmatprep.subr.mxu0 0.0
    %739 = vmatpush1.msra.mxu0 0.0
    %740 = vmatprep.subr.mxu0 0.0
    %741 = vmatpush1.msra.mxu0 0.0
    %742 = vmatprep.mubr.f32.mxu0 0.0
    %743 = vmatmul.mubr.f32.gmra.mrb[0].mxu0 %v661
    %v744 = vpop.f32.mrb[0].mxu0
    %v745 = vadd.f32 0.0, %v744
    %v746 = vpop.f32.mrb[0].mxu0
    %747 = vdwg.mxu0
    %v748 = vld [vmem:[#allocation8] sm:$0xff]
    %v749 = vld [vmem:[#allocation8 + $0x8] sm:$0xff]
    %v750 = vld [vmem:[#allocation8 + $0x10] sm:$0xff]
    %v751 = vld [vmem:[#allocation8 + $0x18] sm:$0xff]
    %v752 = vld [vmem:[#allocation8 + $0x20] sm:$0xff]
    %v753 = vld [vmem:[#allocation8 + $0x28] sm:$0xff]
    %v754 = vld [vmem:[#allocation8 + $0x30] sm:$0xff]
    %v755 = vld [vmem:[#allocation8 + $0x38] sm:$0xff]
    %v756 = vld [vmem:[#allocation8 + $0x40] sm:$0xff]
    %v757 = vld [vmem:[#allocation8 + $0x48] sm:$0xff]
    %v758 = vld [vmem:[#allocation8 + $0x50] sm:$0xff]
    %v759 = vld [vmem:[#allocation8 + $0x58] sm:$0xff]
    %v760 = vld [vmem:[#allocation8 + $0x60] sm:$0xff]
    %v761 = vld [vmem:[#allocation8 + $0x68] sm:$0xff]
    %v762 = vld [vmem:[#allocation8 + $0x70] sm:$0xff]
    %v763 = vld [vmem:[#allocation8 + $0x78] sm:$0xff]
    %v764 = vld [vmem:[%s4] sm:$0x1]
    %v766 = vlaneseq
    %v767 = vshrl.u32 %v766, 7
    %v768 = vsub.s32 0, %v767
    %v769 = vrot.slane %v764, %v768
    %771 = vmatprep.subr.mxu0 0.0
    %772 = vmatpush1.msra.mxu0 %v748
    %773 = vmatprep.subr.mxu0 0.0
    %774 = vmatpush1.msra.mxu0 %v749
    %775 = vmatprep.subr.mxu0 0.0
    %776 = vmatpush1.msra.mxu0 %v750
    %777 = vmatprep.subr.mxu0 0.0
    %778 = vmatpush1.msra.mxu0 %v751
    %779 = vmatprep.subr.mxu0 0.0
    %780 = vmatpush1.msra.mxu0 %v752
    %781 = vmatprep.subr.mxu0 0.0
    %782 = vmatpush1.msra.mxu0 %v753
    %783 = vmatprep.subr.mxu0 0.0
    %784 = vmatpush1.msra.mxu0 %v754
    %785 = vmatprep.subr.mxu0 0.0
    %786 = vmatpush1.msra.mxu0 %v755
    %787 = vmatprep.subr.mxu0 0.0
    %788 = vmatpush1.msra.mxu0 %v756
    %789 = vmatprep.subr.mxu0 0.0
    %790 = vmatpush1.msra.mxu0 %v757
    %791 = vmatprep.subr.mxu0 0.0
    %792 = vmatpush1.msra.mxu0 %v758
    %793 = vmatprep.subr.mxu0 0.0
    %794 = vmatpush1.msra.mxu0 %v759
    %795 = vmatprep.subr.mxu0 0.0
    %796 = vmatpush1.msra.mxu0 %v760
    %797 = vmatprep.subr.mxu0 0.0
    %798 = vmatpush1.msra.mxu0 %v761
    %799 = vmatprep.subr.mxu0 0.0
    %800 = vmatpush1.msra.mxu0 %v762
    %801 = vmatprep.subr.mxu0 0.0
    %802 = vmatpush1.msra.mxu0 %v763
    %803 = vmatprep.subr.mxu0 0.0
    %804 = vmatpush1.msra.mxu0 0.0
    %805 = vmatprep.subr.mxu0 0.0
    %806 = vmatpush1.msra.mxu0 0.0
    %807 = vmatprep.subr.mxu0 0.0
    %808 = vmatpush1.msra.mxu0 0.0
    %809 = vmatprep.subr.mxu0 0.0
    %810 = vmatpush1.msra.mxu0 0.0
    %811 = vmatprep.subr.mxu0 0.0
    %812 = vmatpush1.msra.mxu0 0.0
    %813 = vmatprep.subr.mxu0 0.0
    %814 = vmatpush1.msra.mxu0 0.0
    %815 = vmatprep.subr.mxu0 0.0
    %816 = vmatpush1.msra.mxu0 0.0
    %817 = vmatprep.subr.mxu0 0.0
    %818 = vmatpush1.msra.mxu0 0.0
    %819 = vmatprep.subr.mxu0 0.0
    %820 = vmatpush1.msra.mxu0 0.0
    %821 = vmatprep.subr.mxu0 0.0
    %822 = vmatpush1.msra.mxu0 0.0
    %823 = vmatprep.subr.mxu0 0.0
    %824 = vmatpush1.msra.mxu0 0.0
    %825 = vmatprep.subr.mxu0 0.0
    %826 = vmatpush1.msra.mxu0 0.0
    %827 = vmatprep.subr.mxu0 0.0
    %828 = vmatpush1.msra.mxu0 0.0
    %829 = vmatprep.subr.mxu0 0.0
    %830 = vmatpush1.msra.mxu0 0.0
    %831 = vmatprep.subr.mxu0 0.0
    %832 = vmatpush1.msra.mxu0 0.0
    %833 = vmatprep.subr.mxu0 0.0
    %834 = vmatpush1.msra.mxu0 0.0
    %835 = vmatprep.mubr.f32.mxu0 0.0
    %836 = vmatmul.mubr.f32.gmra.mrb[0].mxu0 %v745
    %v837 = vpop.f32.mrb[0].mxu0
    %v838 = vadd.f32 %v769, %v837
    %v839 = vpop.f32.mrb[0].mxu0
    %840 = vdwg.mxu0
    %s841 = scalar_lea.vmem [#allocation2], 24
    %842 = vst [vmem:[%s841] sm:$0xff] %v838
    %843 = vset.pattern.permute.xlu0 4
    %844 = vperm.xlu0 %843, %v95
    %v845 = vpop.permute.xlu0 %844
    %vm846 = vcmp.eq.s32.totalorder %v845, %v94
    %v847 = vsel %vm846, 1, 0
    %v848 = vcvt.s32.f32 %v847
    %v849 = vld [vmem:[#allocation6] sm:$0xff]
    %v850 = vld [vmem:[#allocation6 + $0x8] sm:$0xff]
    %v851 = vld [vmem:[#allocation6 + $0x10] sm:$0xff]
    %v852 = vld [vmem:[#allocation6 + $0x18] sm:$0xff]
    %v853 = vld [vmem:[#allocation6 + $0x20] sm:$0xff]
    %v854 = vld [vmem:[#allocation6 + $0x28] sm:$0xff]
    %v855 = vld [vmem:[#allocation6 + $0x30] sm:$0xff]
    %v856 = vld [vmem:[#allocation6 + $0x38] sm:$0xff]
    %v857 = vld [vmem:[#allocation6 + $0x40] sm:$0xff]
    %v858 = vld [vmem:[#allocation6 + $0x48] sm:$0xff]
    %v859 = vld [vmem:[#allocation6 + $0x50] sm:$0xff]
    %v860 = vld [vmem:[#allocation6 + $0x58] sm:$0xff]
    %v861 = vld [vmem:[#allocation6 + $0x60] sm:$0xff]
    %v862 = vld [vmem:[#allocation6 + $0x68] sm:$0xff]
    %v863 = vld [vmem:[#allocation6 + $0x70] sm:$0xff]
    %v864 = vld [vmem:[#allocation6 + $0x78] sm:$0xff]
    %865 = vmatprep.subr.mxu0 0.0
    %866 = vmatpush1.msra.mxu0 %v849
    %867 = vmatprep.subr.mxu0 0.0
    %868 = vmatpush1.msra.mxu0 %v850
    %869 = vmatprep.subr.mxu0 0.0
    %870 = vmatpush1.msra.mxu0 %v851
    %871 = vmatprep.subr.mxu0 0.0
    %872 = vmatpush1.msra.mxu0 %v852
    %873 = vmatprep.subr.mxu0 0.0
    %874 = vmatpush1.msra.mxu0 %v853
    %875 = vmatprep.subr.mxu0 0.0
    %876 = vmatpush1.msra.mxu0 %v854
    %877 = vmatprep.subr.mxu0 0.0
    %878 = vmatpush1.msra.mxu0 %v855
    %879 = vmatprep.subr.mxu0 0.0
    %880 = vmatpush1.msra.mxu0 %v856
    %881 = vmatprep.subr.mxu0 0.0
    %882 = vmatpush1.msra.mxu0 %v857
    %883 = vmatprep.subr.mxu0 0.0
    %884 = vmatpush1.msra.mxu0 %v858
    %885 = vmatprep.subr.mxu0 0.0
    %886 = vmatpush1.msra.mxu0 %v859
    %887 = vmatprep.subr.mxu0 0.0
    %888 = vmatpush1.msra.mxu0 %v860
    %889 = vmatprep.subr.mxu0 0.0
    %890 = vmatpush1.msra.mxu0 %v861
    %891 = vmatprep.subr.mxu0 0.0
    %892 = vmatpush1.msra.mxu0 %v862
    %893 = vmatprep.subr.mxu0 0.0
    %894 = vmatpush1.msra.mxu0 %v863
    %895 = vmatprep.subr.mxu0 0.0
    %896 = vmatpush1.msra.mxu0 %v864
    %897 = vmatprep.subr.mxu0 0.0
    %898 = vmatpush1.msra.mxu0 0.0
    %899 = vmatprep.subr.mxu0 0.0
    %900 = vmatpush1.msra.mxu0 0.0
    %901 = vmatprep.subr.mxu0 0.0
    %902 = vmatpush1.msra.mxu0 0.0
    %903 = vmatprep.subr.mxu0 0.0
    %904 = vmatpush1.msra.mxu0 0.0
    %905 = vmatprep.subr.mxu0 0.0
    %906 = vmatpush1.msra.mxu0 0.0
    %907 = vmatprep.subr.mxu0 0.0
    %908 = vmatpush1.msra.mxu0 0.0
    %909 = vmatprep.subr.mxu0 0.0
    %910 = vmatpush1.msra.mxu0 0.0
    %911 = vmatprep.subr.mxu0 0.0
    %912 = vmatpush1.msra.mxu0 0.0
    %913 = vmatprep.subr.mxu0 0.0
    %914 = vmatpush1.msra.mxu0 0.0
    %915 = vmatprep.subr.mxu0 0.0
    %916 = vmatpush1.msra.mxu0 0.0
    %917 = vmatprep.subr.mxu0 0.0
    %918 = vmatpush1.msra.mxu0 0.0
    %919 = vmatprep.subr.mxu0 0.0
    %920 = vmatpush1.msra.mxu0 0.0
    %921 = vmatprep.subr.mxu0 0.0
    %922 = vmatpush1.msra.mxu0 0.0
    %923 = vmatprep.subr.mxu0 0.0
    %924 = vmatpush1.msra.mxu0 0.0
    %925 = vmatprep.subr.mxu0 0.0
    %926 = vmatpush1.msra.mxu0 0.0
    %927 = vmatprep.subr.mxu0 0.0
    %928 = vmatpush1.msra.mxu0 0.0
    %929 = vmatprep.mubr.f32.mxu0 0.0
    %930 = vmatmul.mubr.f32.gmra.mrb[0].mxu0 %v848
    %v931 = vpop.f32.mrb[0].mxu0
    %v932 = vadd.f32 0.0, %v931
    %v933 = vpop.f32.mrb[0].mxu0
    %934 = vdwg.mxu0
    %v935 = vld [vmem:[#allocation8] sm:$0xff]
    %v936 = vld [vmem:[#allocation8 + $0x8] sm:$0xff]
    %v937 = vld [vmem:[#allocation8 + $0x10] sm:$0xff]
    %v938 = vld [vmem:[#allocation8 + $0x18] sm:$0xff]
    %v939 = vld [vmem:[#allocation8 + $0x20] sm:$0xff]
    %v940 = vld [vmem:[#allocation8 + $0x28] sm:$0xff]
    %v941 = vld [vmem:[#allocation8 + $0x30] sm:$0xff]
    %v942 = vld [vmem:[#allocation8 + $0x38] sm:$0xff]
    %v943 = vld [vmem:[#allocation8 + $0x40] sm:$0xff]
    %v944 = vld [vmem:[#allocation8 + $0x48] sm:$0xff]
    %v945 = vld [vmem:[#allocation8 + $0x50] sm:$0xff]
    %v946 = vld [vmem:[#allocation8 + $0x58] sm:$0xff]
    %v947 = vld [vmem:[#allocation8 + $0x60] sm:$0xff]
    %v948 = vld [vmem:[#allocation8 + $0x68] sm:$0xff]
    %v949 = vld [vmem:[#allocation8 + $0x70] sm:$0xff]
    %v950 = vld [vmem:[#allocation8 + $0x78] sm:$0xff]
    %v951 = vld [vmem:[%s4] sm:$0x1]
    %v953 = vlaneseq
    %v954 = vshrl.u32 %v953, 7
    %v955 = vsub.s32 0, %v954
    %v956 = vrot.slane %v951, %v955
    %958 = vmatprep.subr.mxu0 0.0
    %959 = vmatpush1.msra.mxu0 %v935
    %960 = vmatprep.subr.mxu0 0.0
    %961 = vmatpush1.msra.mxu0 %v936
    %962 = vmatprep.subr.mxu0 0.0
    %963 = vmatpush1.msra.mxu0 %v937
    %964 = vmatprep.subr.mxu0 0.0
    %965 = vmatpush1.msra.mxu0 %v938
    %966 = vmatprep.subr.mxu0 0.0
    %967 = vmatpush1.msra.mxu0 %v939
    %968 = vmatprep.subr.mxu0 0.0
    %969 = vmatpush1.msra.mxu0 %v940
    %970 = vmatprep.subr.mxu0 0.0
    %971 = vmatpush1.msra.mxu0 %v941
    %972 = vmatprep.subr.mxu0 0.0
    %973 = vmatpush1.msra.mxu0 %v942
    %974 = vmatprep.subr.mxu0 0.0
    %975 = vmatpush1.msra.mxu0 %v943
    %976 = vmatprep.subr.mxu0 0.0
    %977 = vmatpush1.msra.mxu0 %v944
    %978 = vmatprep.subr.mxu0 0.0
    %979 = vmatpush1.msra.mxu0 %v945
    %980 = vmatprep.subr.mxu0 0.0
    %981 = vmatpush1.msra.mxu0 %v946
    %982 = vmatprep.subr.mxu0 0.0
    %983 = vmatpush1.msra.mxu0 %v947
    %984 = vmatprep.subr.mxu0 0.0
    %985 = vmatpush1.msra.mxu0 %v948
    %986 = vmatprep.subr.mxu0 0.0
    %987 = vmatpush1.msra.mxu0 %v949
    %988 = vmatprep.subr.mxu0 0.0
    %989 = vmatpush1.msra.mxu0 %v950
    %990 = vmatprep.subr.mxu0 0.0
    %991 = vmatpush1.msra.mxu0 0.0
    %992 = vmatprep.subr.mxu0 0.0
    %993 = vmatpush1.msra.mxu0 0.0
    %994 = vmatprep.subr.mxu0 0.0
    %995 = vmatpush1.msra.mxu0 0.0
    %996 = vmatprep.subr.mxu0 0.0
    %997 = vmatpush1.msra.mxu0 0.0
    %998 = vmatprep.subr.mxu0 0.0
    %999 = vmatpush1.msra.mxu0 0.0
    %1000 = vmatprep.subr.mxu0 0.0
    %1001 = vmatpush1.msra.mxu0 0.0
    %1002 = vmatprep.subr.mxu0 0.0
    %1003 = vmatpush1.msra.mxu0 0.0
    %1004 = vmatprep.subr.mxu0 0.0
    %1005 = vmatpush1.msra.mxu0 0.0
    %1006 = vmatprep.subr.mxu0 0.0
    %1007 = vmatpush1.msra.mxu0 0.0
    %1008 = vmatprep.subr.mxu0 0.0
    %1009 = vmatpush1.msra.mxu0 0.0
    %1010 = vmatprep.subr.mxu0 0.0
    %1011 = vmatpush1.msra.mxu0 0.0
    %1012 = vmatprep.subr.mxu0 0.0
    %1013 = vmatpush1.msra.mxu0 0.0
    %1014 = vmatprep.subr.mxu0 0.0
    %1015 = vmatpush1.msra.mxu0 0.0
    %1016 = vmatprep.subr.mxu0 0.0
    %1017 = vmatpush1.msra.mxu0 0.0
    %1018 = vmatprep.subr.mxu0 0.0
    %1019 = vmatpush1.msra.mxu0 0.0
    %1020 = vmatprep.subr.mxu0 0.0
    %1021 = vmatpush1.msra.mxu0 0.0
    %1022 = vmatprep.mubr.f32.mxu0 0.0
    %1023 = vmatmul.mubr.f32.gmra.mrb[0].mxu0 %v932
    %v1024 = vpop.f32.mrb[0].mxu0
    %v1025 = vadd.f32 %v956, %v1024
    %v1026 = vpop.f32.mrb[0].mxu0
    %1027 = vdwg.mxu0
    %s1028 = scalar_lea.vmem [#allocation2], 32
    %1029 = vst [vmem:[%s1028] sm:$0xff] %v1025
    %1030 = vset.pattern.permute.xlu0 5
    %1031 = vperm.xlu0 %1030, %v95
    %v1032 = vpop.permute.xlu0 %1031
    %vm1033 = vcmp.eq.s32.totalorder %v1032, %v94
    %v1034 = vsel %vm1033, 1, 0
    %v1035 = vcvt.s32.f32 %v1034
    %v1036 = vld [vmem:[#allocation6] sm:$0xff]
    %v1037 = vld [vmem:[#allocation6 + $0x8] sm:$0xff]
    %v1038 = vld [vmem:[#allocation6 + $0x10] sm:$0xff]
    %v1039 = vld [vmem:[#allocation6 + $0x18] sm:$0xff]
    %v1040 = vld [vmem:[#allocation6 + $0x20] sm:$0xff]
    %v1041 = vld [vmem:[#allocation6 + $0x28] sm:$0xff]
    %v1042 = vld [vmem:[#allocation6 + $0x30] sm:$0xff]
    %v1043 = vld [vmem:[#allocation6 + $0x38] sm:$0xff]
    %v1044 = vld [vmem:[#allocation6 + $0x40] sm:$0xff]
    %v1045 = vld [vmem:[#allocation6 + $0x48] sm:$0xff]
    %v1046 = vld [vmem:[#allocation6 + $0x50] sm:$0xff]
    %v1047 = vld [vmem:[#allocation6 + $0x58] sm:$0xff]
    %v1048 = vld [vmem:[#allocation6 + $0x60] sm:$0xff]
    %v1049 = vld [vmem:[#allocation6 + $0x68] sm:$0xff]
    %v1050 = vld [vmem:[#allocation6 + $0x70] sm:$0xff]
    %v1051 = vld [vmem:[#allocation6 + $0x78] sm:$0xff]
    %1052 = vmatprep.subr.mxu0 0.0
    %1053 = vmatpush1.msra.mxu0 %v1036
    %1054 = vmatprep.subr.mxu0 0.0
    %1055 = vmatpush1.msra.mxu0 %v1037
    %1056 = vmatprep.subr.mxu0 0.0
    %1057 = vmatpush1.msra.mxu0 %v1038
    %1058 = vmatprep.subr.mxu0 0.0
    %1059 = vmatpush1.msra.mxu0 %v1039
    %1060 = vmatprep.subr.mxu0 0.0
    %1061 = vmatpush1.msra.mxu0 %v1040
    %1062 = vmatprep.subr.mxu0 0.0
    %1063 = vmatpush1.msra.mxu0 %v1041
    %1064 = vmatprep.subr.mxu0 0.0
    %1065 = vmatpush1.msra.mxu0 %v1042
    %1066 = vmatprep.subr.mxu0 0.0
    %1067 = vmatpush1.msra.mxu0 %v1043
    %1068 = vmatprep.subr.mxu0 0.0
    %1069 = vmatpush1.msra.mxu0 %v1044
    %1070 = vmatprep.subr.mxu0 0.0
    %1071 = vmatpush1.msra.mxu0 %v1045
    %1072 = vmatprep.subr.mxu0 0.0
    %1073 = vmatpush1.msra.mxu0 %v1046
    %1074 = vmatprep.subr.mxu0 0.0
    %1075 = vmatpush1.msra.mxu0 %v1047
    %1076 = vmatprep.subr.mxu0 0.0
    %1077 = vmatpush1.msra.mxu0 %v1048
    %1078 = vmatprep.subr.mxu0 0.0
    %1079 = vmatpush1.msra.mxu0 %v1049
    %1080 = vmatprep.subr.mxu0 0.0
    %1081 = vmatpush1.msra.mxu0 %v1050
    %1082 = vmatprep.subr.mxu0 0.0
    %1083 = vmatpush1.msra.mxu0 %v1051
    %1084 = vmatprep.subr.mxu0 0.0
    %1085 = vmatpush1.msra.mxu0 0.0
    %1086 = vmatprep.subr.mxu0 0.0
    %1087 = vmatpush1.msra.mxu0 0.0
    %1088 = vmatprep.subr.mxu0 0.0
    %1089 = vmatpush1.msra.mxu0 0.0
    %1090 = vmatprep.subr.mxu0 0.0
    %1091 = vmatpush1.msra.mxu0 0.0
    %1092 = vmatprep.subr.mxu0 0.0
    %1093 = vmatpush1.msra.mxu0 0.0
    %1094 = vmatprep.subr.mxu0 0.0
    %1095 = vmatpush1.msra.mxu0 0.0
    %1096 = vmatprep.subr.mxu0 0.0
    %1097 = vmatpush1.msra.mxu0 0.0
    %1098 = vmatprep.subr.mxu0 0.0
    %1099 = vmatpush1.msra.mxu0 0.0
    %1100 = vmatprep.subr.mxu0 0.0
    %1101 = vmatpush1.msra.mxu0 0.0
    %1102 = vmatprep.subr.mxu0 0.0
    %1103 = vmatpush1.msra.mxu0 0.0
    %1104 = vmatprep.subr.mxu0 0.0
    %1105 = vmatpush1.msra.mxu0 0.0
    %1106 = vmatprep.subr.mxu0 0.0
    %1107 = vmatpush1.msra.mxu0 0.0
    %1108 = vmatprep.subr.mxu0 0.0
    %1109 = vmatpush1.msra.mxu0 0.0
    %1110 = vmatprep.subr.mxu0 0.0
    %1111 = vmatpush1.msra.mxu0 0.0
    %1112 = vmatprep.subr.mxu0 0.0
    %1113 = vmatpush1.msra.mxu0 0.0
    %1114 = vmatprep.subr.mxu0 0.0
    %1115 = vmatpush1.msra.mxu0 0.0
    %1116 = vmatprep.mubr.f32.mxu0 0.0
    %1117 = vmatmul.mubr.f32.gmra.mrb[0].mxu0 %v1035
    %v1118 = vpop.f32.mrb[0].mxu0
    %v1119 = vadd.f32 0.0, %v1118
    %v1120 = vpop.f32.mrb[0].mxu0
    %1121 = vdwg.mxu0
    %v1122 = vld [vmem:[#allocation8] sm:$0xff]
    %v1123 = vld [vmem:[#allocation8 + $0x8] sm:$0xff]
    %v1124 = vld [vmem:[#allocation8 + $0x10] sm:$0xff]
    %v1125 = vld [vmem:[#allocation8 + $0x18] sm:$0xff]
    %v1126 = vld [vmem:[#allocation8 + $0x20] sm:$0xff]
    %v1127 = vld [vmem:[#allocation8 + $0x28] sm:$0xff]
    %v1128 = vld [vmem:[#allocation8 + $0x30] sm:$0xff]
    %v1129 = vld [vmem:[#allocation8 + $0x38] sm:$0xff]
    %v1130 = vld [vmem:[#allocation8 + $0x40] sm:$0xff]
    %v1131 = vld [vmem:[#allocation8 + $0x48] sm:$0xff]
    %v1132 = vld [vmem:[#allocation8 + $0x50] sm:$0xff]
    %v1133 = vld [vmem:[#allocation8 + $0x58] sm:$0xff]
    %v1134 = vld [vmem:[#allocation8 + $0x60] sm:$0xff]
    %v1135 = vld [vmem:[#allocation8 + $0x68] sm:$0xff]
    %v1136 = vld [vmem:[#allocation8 + $0x70] sm:$0xff]
    %v1137 = vld [vmem:[#allocation8 + $0x78] sm:$0xff]
    %v1138 = vld [vmem:[%s4] sm:$0x1]
    %v1140 = vlaneseq
    %v1141 = vshrl.u32 %v1140, 7
    %v1142 = vsub.s32 0, %v1141
    %v1143 = vrot.slane %v1138, %v1142
    %1145 = vmatprep.subr.mxu0 0.0
    %1146 = vmatpush1.msra.mxu0 %v1122
    %1147 = vmatprep.subr.mxu0 0.0
    %1148 = vmatpush1.msra.mxu0 %v1123
    %1149 = vmatprep.subr.mxu0 0.0
    %1150 = vmatpush1.msra.mxu0 %v1124
    %1151 = vmatprep.subr.mxu0 0.0
    %1152 = vmatpush1.msra.mxu0 %v1125
    %1153 = vmatprep.subr.mxu0 0.0
    %1154 = vmatpush1.msra.mxu0 %v1126
    %1155 = vmatprep.subr.mxu0 0.0
    %1156 = vmatpush1.msra.mxu0 %v1127
    %1157 = vmatprep.subr.mxu0 0.0
    %1158 = vmatpush1.msra.mxu0 %v1128
    %1159 = vmatprep.subr.mxu0 0.0
    %1160 = vmatpush1.msra.mxu0 %v1129
    %1161 = vmatprep.subr.mxu0 0.0
    %1162 = vmatpush1.msra.mxu0 %v1130
    %1163 = vmatprep.subr.mxu0 0.0
    %1164 = vmatpush1.msra.mxu0 %v1131
    %1165 = vmatprep.subr.mxu0 0.0
    %1166 = vmatpush1.msra.mxu0 %v1132
    %1167 = vmatprep.subr.mxu0 0.0
    %1168 = vmatpush1.msra.mxu0 %v1133
    %1169 = vmatprep.subr.mxu0 0.0
    %1170 = vmatpush1.msra.mxu0 %v1134
    %1171 = vmatprep.subr.mxu0 0.0
    %1172 = vmatpush1.msra.mxu0 %v1135
    %1173 = vmatprep.subr.mxu0 0.0
    %1174 = vmatpush1.msra.mxu0 %v1136
    %1175 = vmatprep.subr.mxu0 0.0
    %1176 = vmatpush1.msra.mxu0 %v1137
    %1177 = vmatprep.subr.mxu0 0.0
    %1178 = vmatpush1.msra.mxu0 0.0
    %1179 = vmatprep.subr.mxu0 0.0
    %1180 = vmatpush1.msra.mxu0 0.0
    %1181 = vmatprep.subr.mxu0 0.0
    %1182 = vmatpush1.msra.mxu0 0.0
    %1183 = vmatprep.subr.mxu0 0.0
    %1184 = vmatpush1.msra.mxu0 0.0
    %1185 = vmatprep.subr.mxu0 0.0
    %1186 = vmatpush1.msra.mxu0 0.0
    %1187 = vmatprep.subr.mxu0 0.0
    %1188 = vmatpush1.msra.mxu0 0.0
    %1189 = vmatprep.subr.mxu0 0.0
    %1190 = vmatpush1.msra.mxu0 0.0
    %1191 = vmatprep.subr.mxu0 0.0
    %1192 = vmatpush1.msra.mxu0 0.0
    %1193 = vmatprep.subr.mxu0 0.0
    %1194 = vmatpush1.msra.mxu0 0.0
    %1195 = vmatprep.subr.mxu0 0.0
    %1196 = vmatpush1.msra.mxu0 0.0
    %1197 = vmatprep.subr.mxu0 0.0
    %1198 = vmatpush1.msra.mxu0 0.0
    %1199 = vmatprep.subr.mxu0 0.0
    %1200 = vmatpush1.msra.mxu0 0.0
    %1201 = vmatprep.subr.mxu0 0.0
    %1202 = vmatpush1.msra.mxu0 0.0
    %1203 = vmatprep.subr.mxu0 0.0
    %1204 = vmatpush1.msra.mxu0 0.0
    %1205 = vmatprep.subr.mxu0 0.0
    %1206 = vmatpush1.msra.mxu0 0.0
    %1207 = vmatprep.subr.mxu0 0.0
    %1208 = vmatpush1.msra.mxu0 0.0
    %1209 = vmatprep.mubr.f32.mxu0 0.0
    %1210 = vmatmul.mubr.f32.gmra.mrb[0].mxu0 %v1119
    %v1211 = vpop.f32.mrb[0].mxu0
    %v1212 = vadd.f32 %v1143, %v1211
    %v1213 = vpop.f32.mrb[0].mxu0
    %1214 = vdwg.mxu0
    %s1215 = scalar_lea.vmem [#allocation2], 40
    %1216 = vst [vmem:[%s1215] sm:$0xff] %v1212
    %1217 = vset.pattern.permute.xlu0 6
    %1218 = vperm.xlu0 %1217, %v95
    %v1219 = vpop.permute.xlu0 %1218
    %vm1220 = vcmp.eq.s32.totalorder %v1219, %v94
    %v1221 = vsel %vm1220, 1, 0
    %v1222 = vcvt.s32.f32 %v1221
    %v1223 = vld [vmem:[#allocation6] sm:$0xff]
    %v1224 = vld [vmem:[#allocation6 + $0x8] sm:$0xff]
    %v1225 = vld [vmem:[#allocation6 + $0x10] sm:$0xff]
    %v1226 = vld [vmem:[#allocation6 + $0x18] sm:$0xff]
    %v1227 = vld [vmem:[#allocation6 + $0x20] sm:$0xff]
    %v1228 = vld [vmem:[#allocation6 + $0x28] sm:$0xff]
    %v1229 = vld [vmem:[#allocation6 + $0x30] sm:$0xff]
    %v1230 = vld [vmem:[#allocation6 + $0x38] sm:$0xff]
    %v1231 = vld [vmem:[#allocation6 + $0x40] sm:$0xff]
    %v1232 = vld [vmem:[#allocation6 + $0x48] sm:$0xff]
    %v1233 = vld [vmem:[#allocation6 + $0x50] sm:$0xff]
    %v1234 = vld [vmem:[#allocation6 + $0x58] sm:$0xff]
    %v1235 = vld [vmem:[#allocation6 + $0x60] sm:$0xff]
    %v1236 = vld [vmem:[#allocation6 + $0x68] sm:$0xff]
    %v1237 = vld [vmem:[#allocation6 + $0x70] sm:$0xff]
    %v1238 = vld [vmem:[#allocation6 + $0x78] sm:$0xff]
    %1239 = vmatprep.subr.mxu0 0.0
    %1240 = vmatpush1.msra.mxu0 %v1223
    %1241 = vmatprep.subr.mxu0 0.0
    %1242 = vmatpush1.msra.mxu0 %v1224
    %1243 = vmatprep.subr.mxu0 0.0
    %1244 = vmatpush1.msra.mxu0 %v1225
    %1245 = vmatprep.subr.mxu0 0.0
    %1246 = vmatpush1.msra.mxu0 %v1226
    %1247 = vmatprep.subr.mxu0 0.0
    %1248 = vmatpush1.msra.mxu0 %v1227
    %1249 = vmatprep.subr.mxu0 0.0
    %1250 = vmatpush1.msra.mxu0 %v1228
    %1251 = vmatprep.subr.mxu0 0.0
    %1252 = vmatpush1.msra.mxu0 %v1229
    %1253 = vmatprep.subr.mxu0 0.0
    %1254 = vmatpush1.msra.mxu0 %v1230
    %1255 = vmatprep.subr.mxu0 0.0
    %1256 = vmatpush1.msra.mxu0 %v1231
    %1257 = vmatprep.subr.mxu0 0.0
    %1258 = vmatpush1.msra.mxu0 %v1232
    %1259 = vmatprep.subr.mxu0 0.0
    %1260 = vmatpush1.msra.mxu0 %v1233
    %1261 = vmatprep.subr.mxu0 0.0
    %1262 = vmatpush1.msra.mxu0 %v1234
    %1263 = vmatprep.subr.mxu0 0.0
    %1264 = vmatpush1.msra.mxu0 %v1235
    %1265 = vmatprep.subr.mxu0 0.0
    %1266 = vmatpush1.msra.mxu0 %v1236
    %1267 = vmatprep.subr.mxu0 0.0
    %1268 = vmatpush1.msra.mxu0 %v1237
    %1269 = vmatprep.subr.mxu0 0.0
    %1270 = vmatpush1.msra.mxu0 %v1238
    %1271 = vmatprep.subr.mxu0 0.0
    %1272 = vmatpush1.msra.mxu0 0.0
    %1273 = vmatprep.subr.mxu0 0.0
    %1274 = vmatpush1.msra.mxu0 0.0
    %1275 = vmatprep.subr.mxu0 0.0
    %1276 = vmatpush1.msra.mxu0 0.0
    %1277 = vmatprep.subr.mxu0 0.0
    %1278 = vmatpush1.msra.mxu0 0.0
    %1279 = vmatprep.subr.mxu0 0.0
    %1280 = vmatpush1.msra.mxu0 0.0
    %1281 = vmatprep.subr.mxu0 0.0
    %1282 = vmatpush1.msra.mxu0 0.0
    %1283 = vmatprep.subr.mxu0 0.0
    %1284 = vmatpush1.msra.mxu0 0.0
    %1285 = vmatprep.subr.mxu0 0.0
    %1286 = vmatpush1.msra.mxu0 0.0
    %1287 = vmatprep.subr.mxu0 0.0
    %1288 = vmatpush1.msra.mxu0 0.0
    %1289 = vmatprep.subr.mxu0 0.0
    %1290 = vmatpush1.msra.mxu0 0.0
    %1291 = vmatprep.subr.mxu0 0.0
    %1292 = vmatpush1.msra.mxu0 0.0
    %1293 = vmatprep.subr.mxu0 0.0
    %1294 = vmatpush1.msra.mxu0 0.0
    %1295 = vmatprep.subr.mxu0 0.0
    %1296 = vmatpush1.msra.mxu0 0.0
    %1297 = vmatprep.subr.mxu0 0.0
    %1298 = vmatpush1.msra.mxu0 0.0
    %1299 = vmatprep.subr.mxu0 0.0
    %1300 = vmatpush1.msra.mxu0 0.0
    %1301 = vmatprep.subr.mxu0 0.0
    %1302 = vmatpush1.msra.mxu0 0.0
    %1303 = vmatprep.mubr.f32.mxu0 0.0
    %1304 = vmatmul.mubr.f32.gmra.mrb[0].mxu0 %v1222
    %v1305 = vpop.f32.mrb[0].mxu0
    %v1306 = vadd.f32 0.0, %v1305
    %v1307 = vpop.f32.mrb[0].mxu0
    %1308 = vdwg.mxu0
    %v1309 = vld [vmem:[#allocation8] sm:$0xff]
    %v1310 = vld [vmem:[#allocation8 + $0x8] sm:$0xff]
    %v1311 = vld [vmem:[#allocation8 + $0x10] sm:$0xff]
    %v1312 = vld [vmem:[#allocation8 + $0x18] sm:$0xff]
    %v1313 = vld [vmem:[#allocation8 + $0x20] sm:$0xff]
    %v1314 = vld [vmem:[#allocation8 + $0x28] sm:$0xff]
    %v1315 = vld [vmem:[#allocation8 + $0x30] sm:$0xff]
    %v1316 = vld [vmem:[#allocation8 + $0x38] sm:$0xff]
    %v1317 = vld [vmem:[#allocation8 + $0x40] sm:$0xff]
    %v1318 = vld [vmem:[#allocation8 + $0x48] sm:$0xff]
    %v1319 = vld [vmem:[#allocation8 + $0x50] sm:$0xff]
    %v1320 = vld [vmem:[#allocation8 + $0x58] sm:$0xff]
    %v1321 = vld [vmem:[#allocation8 + $0x60] sm:$0xff]
    %v1322 = vld [vmem:[#allocation8 + $0x68] sm:$0xff]
    %v1323 = vld [vmem:[#allocation8 + $0x70] sm:$0xff]
    %v1324 = vld [vmem:[#allocation8 + $0x78] sm:$0xff]
    %v1325 = vld [vmem:[%s4] sm:$0x1]
    %v1327 = vlaneseq
    %v1328 = vshrl.u32 %v1327, 7
    %v1329 = vsub.s32 0, %v1328
    %v1330 = vrot.slane %v1325, %v1329
    %1332 = vmatprep.subr.mxu0 0.0
    %1333 = vmatpush1.msra.mxu0 %v1309
    %1334 = vmatprep.subr.mxu0 0.0
    %1335 = vmatpush1.msra.mxu0 %v1310
    %1336 = vmatprep.subr.mxu0 0.0
    %1337 = vmatpush1.msra.mxu0 %v1311
    %1338 = vmatprep.subr.mxu0 0.0
    %1339 = vmatpush1.msra.mxu0 %v1312
    %1340 = vmatprep.subr.mxu0 0.0
    %1341 = vmatpush1.msra.mxu0 %v1313
    %1342 = vmatprep.subr.mxu0 0.0
    %1343 = vmatpush1.msra.mxu0 %v1314
    %1344 = vmatprep.subr.mxu0 0.0
    %1345 = vmatpush1.msra.mxu0 %v1315
    %1346 = vmatprep.subr.mxu0 0.0
    %1347 = vmatpush1.msra.mxu0 %v1316
    %1348 = vmatprep.subr.mxu0 0.0
    %1349 = vmatpush1.msra.mxu0 %v1317
    %1350 = vmatprep.subr.mxu0 0.0
    %1351 = vmatpush1.msra.mxu0 %v1318
    %1352 = vmatprep.subr.mxu0 0.0
    %1353 = vmatpush1.msra.mxu0 %v1319
    %1354 = vmatprep.subr.mxu0 0.0
    %1355 = vmatpush1.msra.mxu0 %v1320
    %1356 = vmatprep.subr.mxu0 0.0
    %1357 = vmatpush1.msra.mxu0 %v1321
    %1358 = vmatprep.subr.mxu0 0.0
    %1359 = vmatpush1.msra.mxu0 %v1322
    %1360 = vmatprep.subr.mxu0 0.0
    %1361 = vmatpush1.msra.mxu0 %v1323
    %1362 = vmatprep.subr.mxu0 0.0
    %1363 = vmatpush1.msra.mxu0 %v1324
    %1364 = vmatprep.subr.mxu0 0.0
    %1365 = vmatpush1.msra.mxu0 0.0
    %1366 = vmatprep.subr.mxu0 0.0
    %1367 = vmatpush1.msra.mxu0 0.0
    %1368 = vmatprep.subr.mxu0 0.0
    %1369 = vmatpush1.msra.mxu0 0.0
    %1370 = vmatprep.subr.mxu0 0.0
    %1371 = vmatpush1.msra.mxu0 0.0
    %1372 = vmatprep.subr.mxu0 0.0
    %1373 = vmatpush1.msra.mxu0 0.0
    %1374 = vmatprep.subr.mxu0 0.0
    %1375 = vmatpush1.msra.mxu0 0.0
    %1376 = vmatprep.subr.mxu0 0.0
    %1377 = vmatpush1.msra.mxu0 0.0
    %1378 = vmatprep.subr.mxu0 0.0
    %1379 = vmatpush1.msra.mxu0 0.0
    %1380 = vmatprep.subr.mxu0 0.0
    %1381 = vmatpush1.msra.mxu0 0.0
    %1382 = vmatprep.subr.mxu0 0.0
    %1383 = vmatpush1.msra.mxu0 0.0
    %1384 = vmatprep.subr.mxu0 0.0
    %1385 = vmatpush1.msra.mxu0 0.0
    %1386 = vmatprep.subr.mxu0 0.0
    %1387 = vmatpush1.msra.mxu0 0.0
    %1388 = vmatprep.subr.mxu0 0.0
    %1389 = vmatpush1.msra.mxu0 0.0
    %1390 = vmatprep.subr.mxu0 0.0
    %1391 = vmatpush1.msra.mxu0 0.0
    %1392 = vmatprep.subr.mxu0 0.0
    %1393 = vmatpush1.msra.mxu0 0.0
    %1394 = vmatprep.subr.mxu0 0.0
    %1395 = vmatpush1.msra.mxu0 0.0
    %1396 = vmatprep.mubr.f32.mxu0 0.0
    %1397 = vmatmul.mubr.f32.gmra.mrb[0].mxu0 %v1306
    %v1398 = vpop.f32.mrb[0].mxu0
    %v1399 = vadd.f32 %v1330, %v1398
    %v1400 = vpop.f32.mrb[0].mxu0
    %1401 = vdwg.mxu0
    %s1402 = scalar_lea.vmem [#allocation2], 48
    %1403 = vst [vmem:[%s1402] sm:$0xff] %v1399
    %1404 = vset.pattern.permute.xlu0 7
    %1405 = vperm.xlu0 %1404, %v95
    %v1406 = vpop.permute.xlu0 %1405
    %vm1407 = vcmp.eq.s32.totalorder %v1406, %v94
    %v1408 = vsel %vm1407, 1, 0
    %v1409 = vcvt.s32.f32 %v1408
    %v1410 = vld [vmem:[#allocation6] sm:$0xff]
    %v1411 = vld [vmem:[#allocation6 + $0x8] sm:$0xff]
    %v1412 = vld [vmem:[#allocation6 + $0x10] sm:$0xff]
    %v1413 = vld [vmem:[#allocation6 + $0x18] sm:$0xff]
    %v1414 = vld [vmem:[#allocation6 + $0x20] sm:$0xff]
    %v1415 = vld [vmem:[#allocation6 + $0x28] sm:$0xff]
    %v1416 = vld [vmem:[#allocation6 + $0x30] sm:$0xff]
    %v1417 = vld [vmem:[#allocation6 + $0x38] sm:$0xff]
    %v1418 = vld [vmem:[#allocation6 + $0x40] sm:$0xff]
    %v1419 = vld [vmem:[#allocation6 + $0x48] sm:$0xff]
    %v1420 = vld [vmem:[#allocation6 + $0x50] sm:$0xff]
    %v1421 = vld [vmem:[#allocation6 + $0x58] sm:$0xff]
    %v1422 = vld [vmem:[#allocation6 + $0x60] sm:$0xff]
    %v1423 = vld [vmem:[#allocation6 + $0x68] sm:$0xff]
    %v1424 = vld [vmem:[#allocation6 + $0x70] sm:$0xff]
    %v1425 = vld [vmem:[#allocation6 + $0x78] sm:$0xff]
    %1426 = vmatprep.subr.mxu0 0.0
    %1427 = vmatpush1.msra.mxu0 %v1410
    %1428 = vmatprep.subr.mxu0 0.0
    %1429 = vmatpush1.msra.mxu0 %v1411
    %1430 = vmatprep.subr.mxu0 0.0
    %1431 = vmatpush1.msra.mxu0 %v1412
    %1432 = vmatprep.subr.mxu0 0.0
    %1433 = vmatpush1.msra.mxu0 %v1413
    %1434 = vmatprep.subr.mxu0 0.0
    %1435 = vmatpush1.msra.mxu0 %v1414
    %1436 = vmatprep.subr.mxu0 0.0
    %1437 = vmatpush1.msra.mxu0 %v1415
    %1438 = vmatprep.subr.mxu0 0.0
    %1439 = vmatpush1.msra.mxu0 %v1416
    %1440 = vmatprep.subr.mxu0 0.0
    %1441 = vmatpush1.msra.mxu0 %v1417
    %1442 = vmatprep.subr.mxu0 0.0
    %1443 = vmatpush1.msra.mxu0 %v1418
    %1444 = vmatprep.subr.mxu0 0.0
    %1445 = vmatpush1.msra.mxu0 %v1419
    %1446 = vmatprep.subr.mxu0 0.0
    %1447 = vmatpush1.msra.mxu0 %v1420
    %1448 = vmatprep.subr.mxu0 0.0
    %1449 = vmatpush1.msra.mxu0 %v1421
    %1450 = vmatprep.subr.mxu0 0.0
    %1451 = vmatpush1.msra.mxu0 %v1422
    %1452 = vmatprep.subr.mxu0 0.0
    %1453 = vmatpush1.msra.mxu0 %v1423
    %1454 = vmatprep.subr.mxu0 0.0
    %1455 = vmatpush1.msra.mxu0 %v1424
    %1456 = vmatprep.subr.mxu0 0.0
    %1457 = vmatpush1.msra.mxu0 %v1425
    %1458 = vmatprep.subr.mxu0 0.0
    %1459 = vmatpush1.msra.mxu0 0.0
    %1460 = vmatprep.subr.mxu0 0.0
    %1461 = vmatpush1.msra.mxu0 0.0
    %1462 = vmatprep.subr.mxu0 0.0
    %1463 = vmatpush1.msra.mxu0 0.0
    %1464 = vmatprep.subr.mxu0 0.0
    %1465 = vmatpush1.msra.mxu0 0.0
    %1466 = vmatprep.subr.mxu0 0.0
    %1467 = vmatpush1.msra.mxu0 0.0
    %1468 = vmatprep.subr.mxu0 0.0
    %1469 = vmatpush1.msra.mxu0 0.0
    %1470 = vmatprep.subr.mxu0 0.0
    %1471 = vmatpush1.msra.mxu0 0.0
    %1472 = vmatprep.subr.mxu0 0.0
    %1473 = vmatpush1.msra.mxu0 0.0
    %1474 = vmatprep.subr.mxu0 0.0
    %1475 = vmatpush1.msra.mxu0 0.0
    %1476 = vmatprep.subr.mxu0 0.0
    %1477 = vmatpush1.msra.mxu0 0.0
    %1478 = vmatprep.subr.mxu0 0.0
    %1479 = vmatpush1.msra.mxu0 0.0
    %1480 = vmatprep.subr.mxu0 0.0
    %1481 = vmatpush1.msra.mxu0 0.0
    %1482 = vmatprep.subr.mxu0 0.0
    %1483 = vmatpush1.msra.mxu0 0.0
    %1484 = vmatprep.subr.mxu0 0.0
    %1485 = vmatpush1.msra.mxu0 0.0
    %1486 = vmatprep.subr.mxu0 0.0
    %1487 = vmatpush1.msra.mxu0 0.0
    %1488 = vmatprep.subr.mxu0 0.0
    %1489 = vmatpush1.msra.mxu0 0.0
    %1490 = vmatprep.mubr.f32.mxu0 0.0
    %1491 = vmatmul.mubr.f32.gmra.mrb[0].mxu0 %v1409
    %v1492 = vpop.f32.mrb[0].mxu0
    %v1493 = vadd.f32 0.0, %v1492
    %v1494 = vpop.f32.mrb[0].mxu0
    %1495 = vdwg.mxu0
    %v1496 = vld [vmem:[#allocation8] sm:$0xff]
    %v1497 = vld [vmem:[#allocation8 + $0x8] sm:$0xff]
    %v1498 = vld [vmem:[#allocation8 + $0x10] sm:$0xff]
    %v1499 = vld [vmem:[#allocation8 + $0x18] sm:$0xff]
    %v1500 = vld [vmem:[#allocation8 + $0x20] sm:$0xff]
    %v1501 = vld [vmem:[#allocation8 + $0x28] sm:$0xff]
    %v1502 = vld [vmem:[#allocation8 + $0x30] sm:$0xff]
    %v1503 = vld [vmem:[#allocation8 + $0x38] sm:$0xff]
    %v1504 = vld [vmem:[#allocation8 + $0x40] sm:$0xff]
    %v1505 = vld [vmem:[#allocation8 + $0x48] sm:$0xff]
    %v1506 = vld [vmem:[#allocation8 + $0x50] sm:$0xff]
    %v1507 = vld [vmem:[#allocation8 + $0x58] sm:$0xff]
    %v1508 = vld [vmem:[#allocation8 + $0x60] sm:$0xff]
    %v1509 = vld [vmem:[#allocation8 + $0x68] sm:$0xff]
    %v1510 = vld [vmem:[#allocation8 + $0x70] sm:$0xff]
    %v1511 = vld [vmem:[#allocation8 + $0x78] sm:$0xff]
    %v1512 = vld [vmem:[%s4] sm:$0x1]
    %v1514 = vlaneseq
    %v1515 = vshrl.u32 %v1514, 7
    %v1516 = vsub.s32 0, %v1515
    %v1517 = vrot.slane %v1512, %v1516
    %1519 = vmatprep.subr.mxu0 0.0
    %1520 = vmatpush1.msra.mxu0 %v1496
    %1521 = vmatprep.subr.mxu0 0.0
    %1522 = vmatpush1.msra.mxu0 %v1497
    %1523 = vmatprep.subr.mxu0 0.0
    %1524 = vmatpush1.msra.mxu0 %v1498
    %1525 = vmatprep.subr.mxu0 0.0
    %1526 = vmatpush1.msra.mxu0 %v1499
    %1527 = vmatprep.subr.mxu0 0.0
    %1528 = vmatpush1.msra.mxu0 %v1500
    %1529 = vmatprep.subr.mxu0 0.0
    %1530 = vmatpush1.msra.mxu0 %v1501
    %1531 = vmatprep.subr.mxu0 0.0
    %1532 = vmatpush1.msra.mxu0 %v1502
    %1533 = vmatprep.subr.mxu0 0.0
    %1534 = vmatpush1.msra.mxu0 %v1503
    %1535 = vmatprep.subr.mxu0 0.0
    %1536 = vmatpush1.msra.mxu0 %v1504
    %1537 = vmatprep.subr.mxu0 0.0
    %1538 = vmatpush1.msra.mxu0 %v1505
    %1539 = vmatprep.subr.mxu0 0.0
    %1540 = vmatpush1.msra.mxu0 %v1506
    %1541 = vmatprep.subr.mxu0 0.0
    %1542 = vmatpush1.msra.mxu0 %v1507
    %1543 = vmatprep.subr.mxu0 0.0
    %1544 = vmatpush1.msra.mxu0 %v1508
    %1545 = vmatprep.subr.mxu0 0.0
    %1546 = vmatpush1.msra.mxu0 %v1509
    %1547 = vmatprep.subr.mxu0 0.0
    %1548 = vmatpush1.msra.mxu0 %v1510
    %1549 = vmatprep.subr.mxu0 0.0
    %1550 = vmatpush1.msra.mxu0 %v1511
    %1551 = vmatprep.subr.mxu0 0.0
    %1552 = vmatpush1.msra.mxu0 0.0
    %1553 = vmatprep.subr.mxu0 0.0
    %1554 = vmatpush1.msra.mxu0 0.0
    %1555 = vmatprep.subr.mxu0 0.0
    %1556 = vmatpush1.msra.mxu0 0.0
    %1557 = vmatprep.subr.mxu0 0.0
    %1558 = vmatpush1.msra.mxu0 0.0
    %1559 = vmatprep.subr.mxu0 0.0
    %1560 = vmatpush1.msra.mxu0 0.0
    %1561 = vmatprep.subr.mxu0 0.0
    %1562 = vmatpush1.msra.mxu0 0.0
    %1563 = vmatprep.subr.mxu0 0.0
    %1564 = vmatpush1.msra.mxu0 0.0
    %1565 = vmatprep.subr.mxu0 0.0
    %1566 = vmatpush1.msra.mxu0 0.0
    %1567 = vmatprep.subr.mxu0 0.0
    %1568 = vmatpush1.msra.mxu0 0.0
    %1569 = vmatprep.subr.mxu0 0.0
    %1570 = vmatpush1.msra.mxu0 0.0
    %1571 = vmatprep.subr.mxu0 0.0
    %1572 = vmatpush1.msra.mxu0 0.0
    %1573 = vmatprep.subr.mxu0 0.0
    %1574 = vmatpush1.msra.mxu0 0.0
    %1575 = vmatprep.subr.mxu0 0.0
    %1576 = vmatpush1.msra.mxu0 0.0
    %1577 = vmatprep.subr.mxu0 0.0
    %1578 = vmatpush1.msra.mxu0 0.0
    %1579 = vmatprep.subr.mxu0 0.0
    %1580 = vmatpush1.msra.mxu0 0.0
    %1581 = vmatprep.subr.mxu0 0.0
    %1582 = vmatpush1.msra.mxu0 0.0
    %1583 = vmatprep.mubr.f32.mxu0 0.0
    %1584 = vmatmul.mubr.f32.gmra.mrb[0].mxu0 %v1493
    %v1585 = vpop.f32.mrb[0].mxu0
    %v1586 = vadd.f32 %v1517, %v1585
    %v1587 = vpop.f32.mrb[0].mxu0
    %1588 = vdwg.mxu0
    %s1589 = scalar_lea.vmem [#allocation2], 56
    %1590 = vst [vmem:[%s1589] sm:$0xff] %v1586
    %v1591 = vld [vmem:[#allocation2] sm:$0xff]
    %v1592 = vld [vmem:[#allocation9] sm:$0xff]
    %v1593 = vld [vmem:[#allocation9 + $0x8] sm:$0xff]
    %v1594 = vld [vmem:[#allocation9 + $0x10] sm:$0xff]
    %v1595 = vld [vmem:[#allocation9 + $0x18] sm:$0xff]
    %v1596 = vld [vmem:[#allocation9 + $0x20] sm:$0xff]
    %v1597 = vld [vmem:[#allocation9 + $0x28] sm:$0xff]
    %v1598 = vld [vmem:[#allocation9 + $0x30] sm:$0xff]
    %v1599 = vld [vmem:[#allocation9 + $0x38] sm:$0xff]
    %v1600 = vld [vmem:[#allocation9 + $0x40] sm:$0xff]
    %v1601 = vld [vmem:[#allocation9 + $0x48] sm:$0xff]
    %v1602 = vld [vmem:[#allocation9 + $0x50] sm:$0xff]
    %v1603 = vld [vmem:[#allocation9 + $0x58] sm:$0xff]
    %v1604 = vld [vmem:[#allocation9 + $0x60] sm:$0xff]
    %v1605 = vld [vmem:[#allocation9 + $0x68] sm:$0xff]
    %v1606 = vld [vmem:[#allocation9 + $0x70] sm:$0xff]
    %v1607 = vld [vmem:[#allocation9 + $0x78] sm:$0xff]
    %1608 = vmatprep.subr.mxu0 0.0
    %1609 = vmatpush1.msra.mxu0 %v1592
    %1610 = vmatprep.subr.mxu0 0.0
    %1611 = vmatpush1.msra.mxu0 %v1593
    %1612 = vmatprep.subr.mxu0 0.0
    %1613 = vmatpush1.msra.mxu0 %v1594
    %1614 = vmatprep.subr.mxu0 0.0
    %1615 = vmatpush1.msra.mxu0 %v1595
    %1616 = vmatprep.subr.mxu0 0.0
    %1617 = vmatpush1.msra.mxu0 %v1596
    %1618 = vmatprep.subr.mxu0 0.0
    %1619 = vmatpush1.msra.mxu0 %v1597
    %1620 = vmatprep.subr.mxu0 0.0
    %1621 = vmatpush1.msra.mxu0 %v1598
    %1622 = vmatprep.subr.mxu0 0.0
    %1623 = vmatpush1.msra.mxu0 %v1599
    %1624 = vmatprep.subr.mxu0 0.0
    %1625 = vmatpush1.msra.mxu0 %v1600
    %1626 = vmatprep.subr.mxu0 0.0
    %1627 = vmatpush1.msra.mxu0 %v1601
    %1628 = vmatprep.subr.mxu0 0.0
    %1629 = vmatpush1.msra.mxu0 %v1602
    %1630 = vmatprep.subr.mxu0 0.0
    %1631 = vmatpush1.msra.mxu0 %v1603
    %1632 = vmatprep.subr.mxu0 0.0
    %1633 = vmatpush1.msra.mxu0 %v1604
    %1634 = vmatprep.subr.mxu0 0.0
    %1635 = vmatpush1.msra.mxu0 %v1605
    %1636 = vmatprep.subr.mxu0 0.0
    %1637 = vmatpush1.msra.mxu0 %v1606
    %1638 = vmatprep.subr.mxu0 0.0
    %1639 = vmatpush1.msra.mxu0 %v1607
    %1640 = vmatprep.subr.mxu0 0.0
    %1641 = vmatpush1.msra.mxu0 0.0
    %1642 = vmatprep.subr.mxu0 0.0
    %1643 = vmatpush1.msra.mxu0 0.0
    %1644 = vmatprep.subr.mxu0 0.0
    %1645 = vmatpush1.msra.mxu0 0.0
    %1646 = vmatprep.subr.mxu0 0.0
    %1647 = vmatpush1.msra.mxu0 0.0
    %1648 = vmatprep.subr.mxu0 0.0
    %1649 = vmatpush1.msra.mxu0 0.0
    %1650 = vmatprep.subr.mxu0 0.0
    %1651 = vmatpush1.msra.mxu0 0.0
    %1652 = vmatprep.subr.mxu0 0.0
    %1653 = vmatpush1.msra.mxu0 0.0
    %1654 = vmatprep.subr.mxu0 0.0
    %1655 = vmatpush1.msra.mxu0 0.0
    %1656 = vmatprep.subr.mxu0 0.0
    %1657 = vmatpush1.msra.mxu0 0.0
    %1658 = vmatprep.subr.mxu0 0.0
    %1659 = vmatpush1.msra.mxu0 0.0
    %1660 = vmatprep.subr.mxu0 0.0
    %1661 = vmatpush1.msra.mxu0 0.0
    %1662 = vmatprep.subr.mxu0 0.0
    %1663 = vmatpush1.msra.mxu0 0.0
    %1664 = vmatprep.subr.mxu0 0.0
    %1665 = vmatpush1.msra.mxu0 0.0
    %1666 = vmatprep.subr.mxu0 0.0
    %1667 = vmatpush1.msra.mxu0 0.0
    %1668 = vmatprep.subr.mxu0 0.0
    %1669 = vmatpush1.msra.mxu0 0.0
    %1670 = vmatprep.subr.mxu0 0.0
    %1671 = vmatpush1.msra.mxu0 0.0
    %1672 = vmatprep.mubr.f32.mxu0 0.0
    %1673 = vmatmul.mubr.f32.gmra.mrb[0].mxu0 0.0
    %v1674 = vpop.f32.mrb[0].mxu0
    %v1675 = vadd.f32 0.0, %v1674
    %v1676 = vpop.f32.mrb[0].mxu0
    %1677 = vdwg.mxu0
    %v1678 = vadd.f32 %v1591, %v1675
    %v1679 = vtanh.pop %v1678
    %v1680 = vld [vmem:[%s467] sm:$0xff]
    %1681 = vmatprep.subr.mxu0 0.0
    %1682 = vmatpush1.msra.mxu0 %v1592
    %1683 = vmatprep.subr.mxu0 0.0
    %1684 = vmatpush1.msra.mxu0 %v1593
    %1685 = vmatprep.subr.mxu0 0.0
    %1686 = vmatpush1.msra.mxu0 %v1594
    %1687 = vmatprep.subr.mxu0 0.0
    %1688 = vmatpush1.msra.mxu0 %v1595
    %1689 = vmatprep.subr.mxu0 0.0
    %1690 = vmatpush1.msra.mxu0 %v1596
    %1691 = vmatprep.subr.mxu0 0.0
    %1692 = vmatpush1.msra.mxu0 %v1597
    %1693 = vmatprep.subr.mxu0 0.0
    %1694 = vmatpush1.msra.mxu0 %v1598
    %1695 = vmatprep.subr.mxu0 0.0
    %1696 = vmatpush1.msra.mxu0 %v1599
    %1697 = vmatprep.subr.mxu0 0.0
    %1698 = vmatpush1.msra.mxu0 %v1600
    %1699 = vmatprep.subr.mxu0 0.0
    %1700 = vmatpush1.msra.mxu0 %v1601
    %1701 = vmatprep.subr.mxu0 0.0
    %1702 = vmatpush1.msra.mxu0 %v1602
    %1703 = vmatprep.subr.mxu0 0.0
    %1704 = vmatpush1.msra.mxu0 %v1603
    %1705 = vmatprep.subr.mxu0 0.0
    %1706 = vmatpush1.msra.mxu0 %v1604
    %1707 = vmatprep.subr.mxu0 0.0
    %1708 = vmatpush1.msra.mxu0 %v1605
    %1709 = vmatprep.subr.mxu0 0.0
    %1710 = vmatpush1.msra.mxu0 %v1606
    %1711 = vmatprep.subr.mxu0 0.0
    %1712 = vmatpush1.msra.mxu0 %v1607
    %1713 = vmatprep.subr.mxu0 0.0
    %1714 = vmatpush1.msra.mxu0 0.0
    %1715 = vmatprep.subr.mxu0 0.0
    %1716 = vmatpush1.msra.mxu0 0.0
    %1717 = vmatprep.subr.mxu0 0.0
    %1718 = vmatpush1.msra.mxu0 0.0
    %1719 = vmatprep.subr.mxu0 0.0
    %1720 = vmatpush1.msra.mxu0 0.0
    %1721 = vmatprep.subr.mxu0 0.0
    %1722 = vmatpush1.msra.mxu0 0.0
    %1723 = vmatprep.subr.mxu0 0.0
    %1724 = vmatpush1.msra.mxu0 0.0
    %1725 = vmatprep.subr.mxu0 0.0
    %1726 = vmatpush1.msra.mxu0 0.0
    %1727 = vmatprep.subr.mxu0 0.0
    %1728 = vmatpush1.msra.mxu0 0.0
    %1729 = vmatprep.subr.mxu0 0.0
    %1730 = vmatpush1.msra.mxu0 0.0
    %1731 = vmatprep.subr.mxu0 0.0
    %1732 = vmatpush1.msra.mxu0 0.0
    %1733 = vmatprep.subr.mxu0 0.0
    %1734 = vmatpush1.msra.mxu0 0.0
    %1735 = vmatprep.subr.mxu0 0.0
    %1736 = vmatpush1.msra.mxu0 0.0
    %1737 = vmatprep.subr.mxu0 0.0
    %1738 = vmatpush1.msra.mxu0 0.0
    %1739 = vmatprep.subr.mxu0 0.0
    %1740 = vmatpush1.msra.mxu0 0.0
    %1741 = vmatprep.subr.mxu0 0.0
    %1742 = vmatpush1.msra.mxu0 0.0
    %1743 = vmatprep.subr.mxu0 0.0
    %1744 = vmatpush1.msra.mxu0 0.0
    %1745 = vmatprep.mubr.f32.mxu0 0.0
    %1746 = vmatmul.mubr.f32.gmra.mrb[0].mxu0 %v1679
    %v1747 = vpop.f32.mrb[0].mxu0
    %v1748 = vadd.f32 0.0, %v1747
    %v1749 = vpop.f32.mrb[0].mxu0
    %1750 = vdwg.mxu0
    %v1751 = vadd.f32 %v1680, %v1748
    %v1752 = vtanh.pop %v1751
    %v1753 = vld [vmem:[%s654] sm:$0xff]
    %1754 = vmatprep.subr.mxu0 0.0
    %1755 = vmatpush1.msra.mxu0 %v1592
    %1756 = vmatprep.subr.mxu0 0.0
    %1757 = vmatpush1.msra.mxu0 %v1593
    %1758 = vmatprep.subr.mxu0 0.0
    %1759 = vmatpush1.msra.mxu0 %v1594
    %1760 = vmatprep.subr.mxu0 0.0
    %1761 = vmatpush1.msra.mxu0 %v1595
    %1762 = vmatprep.subr.mxu0 0.0
    %1763 = vmatpush1.msra.mxu0 %v1596
    %1764 = vmatprep.subr.mxu0 0.0
    %1765 = vmatpush1.msra.mxu0 %v1597
    %1766 = vmatprep.subr.mxu0 0.0
    %1767 = vmatpush1.msra.mxu0 %v1598
    %1768 = vmatprep.subr.mxu0 0.0
    %1769 = vmatpush1.msra.mxu0 %v1599
    %1770 = vmatprep.subr.mxu0 0.0
    %1771 = vmatpush1.msra.mxu0 %v1600
    %1772 = vmatprep.subr.mxu0 0.0
    %1773 = vmatpush1.msra.mxu0 %v1601
    %1774 = vmatprep.subr.mxu0 0.0
    %1775 = vmatpush1.msra.mxu0 %v1602
    %1776 = vmatprep.subr.mxu0 0.0
    %1777 = vmatpush1.msra.mxu0 %v1603
    %1778 = vmatprep.subr.mxu0 0.0
    %1779 = vmatpush1.msra.mxu0 %v1604
    %1780 = vmatprep.subr.mxu0 0.0
    %1781 = vmatpush1.msra.mxu0 %v1605
    %1782 = vmatprep.subr.mxu0 0.0
    %1783 = vmatpush1.msra.mxu0 %v1606
    %1784 = vmatprep.subr.mxu0 0.0
    %1785 = vmatpush1.msra.mxu0 %v1607
    %1786 = vmatprep.subr.mxu0 0.0
    %1787 = vmatpush1.msra.mxu0 0.0
    %1788 = vmatprep.subr.mxu0 0.0
    %1789 = vmatpush1.msra.mxu0 0.0
    %1790 = vmatprep.subr.mxu0 0.0
    %1791 = vmatpush1.msra.mxu0 0.0
    %1792 = vmatprep.subr.mxu0 0.0
    %1793 = vmatpush1.msra.mxu0 0.0
    %1794 = vmatprep.subr.mxu0 0.0
    %1795 = vmatpush1.msra.mxu0 0.0
    %1796 = vmatprep.subr.mxu0 0.0
    %1797 = vmatpush1.msra.mxu0 0.0
    %1798 = vmatprep.subr.mxu0 0.0
    %1799 = vmatpush1.msra.mxu0 0.0
    %1800 = vmatprep.subr.mxu0 0.0
    %1801 = vmatpush1.msra.mxu0 0.0
    %1802 = vmatprep.subr.mxu0 0.0
    %1803 = vmatpush1.msra.mxu0 0.0
    %1804 = vmatprep.subr.mxu0 0.0
    %1805 = vmatpush1.msra.mxu0 0.0
    %1806 = vmatprep.subr.mxu0 0.0
    %1807 = vmatpush1.msra.mxu0 0.0
    %1808 = vmatprep.subr.mxu0 0.0
    %1809 = vmatpush1.msra.mxu0 0.0
    %1810 = vmatprep.subr.mxu0 0.0
    %1811 = vmatpush1.msra.mxu0 0.0
    %1812 = vmatprep.subr.mxu0 0.0
    %1813 = vmatpush1.msra.mxu0 0.0
    %1814 = vmatprep.subr.mxu0 0.0
    %1815 = vmatpush1.msra.mxu0 0.0
    %1816 = vmatprep.subr.mxu0 0.0
    %1817 = vmatpush1.msra.mxu0 0.0
    %1818 = vmatprep.mubr.f32.mxu0 0.0
    %1819 = vmatmul.mubr.f32.gmra.mrb[0].mxu0 %v1752
    %v1820 = vpop.f32.mrb[0].mxu0
    %v1821 = vadd.f32 0.0, %v1820
    %v1822 = vpop.f32.mrb[0].mxu0
    %1823 = vdwg.mxu0
    %v1824 = vadd.f32 %v1753, %v1821
    %v1825 = vtanh.pop %v1824
    %v1826 = vld [vmem:[%s841] sm:$0xff]
    %1827 = vmatprep.subr.mxu0 0.0
    %1828 = vmatpush1.msra.mxu0 %v1592
    %1829 = vmatprep.subr.mxu0 0.0
    %1830 = vmatpush1.msra.mxu0 %v1593
    %1831 = vmatprep.subr.mxu0 0.0
    %1832 = vmatpush1.msra.mxu0 %v1594
    %1833 = vmatprep.subr.mxu0 0.0
    %1834 = vmatpush1.msra.mxu0 %v1595
    %1835 = vmatprep.subr.mxu0 0.0
    %1836 = vmatpush1.msra.mxu0 %v1596
    %1837 = vmatprep.subr.mxu0 0.0
    %1838 = vmatpush1.msra.mxu0 %v1597
    %1839 = vmatprep.subr.mxu0 0.0
    %1840 = vmatpush1.msra.mxu0 %v1598
    %1841 = vmatprep.subr.mxu0 0.0
    %1842 = vmatpush1.msra.mxu0 %v1599
    %1843 = vmatprep.subr.mxu0 0.0
    %1844 = vmatpush1.msra.mxu0 %v1600
    %1845 = vmatprep.subr.mxu0 0.0
    %1846 = vmatpush1.msra.mxu0 %v1601
    %1847 = vmatprep.subr.mxu0 0.0
    %1848 = vmatpush1.msra.mxu0 %v1602
    %1849 = vmatprep.subr.mxu0 0.0
    %1850 = vmatpush1.msra.mxu0 %v1603
    %1851 = vmatprep.subr.mxu0 0.0
    %1852 = vmatpush1.msra.mxu0 %v1604
    %1853 = vmatprep.subr.mxu0 0.0
    %1854 = vmatpush1.msra.mxu0 %v1605
    %1855 = vmatprep.subr.mxu0 0.0
    %1856 = vmatpush1.msra.mxu0 %v1606
    %1857 = vmatprep.subr.mxu0 0.0
    %1858 = vmatpush1.msra.mxu0 %v1607
    %1859 = vmatprep.subr.mxu0 0.0
    %1860 = vmatpush1.msra.mxu0 0.0
    %1861 = vmatprep.subr.mxu0 0.0
    %1862 = vmatpush1.msra.mxu0 0.0
    %1863 = vmatprep.subr.mxu0 0.0
    %1864 = vmatpush1.msra.mxu0 0.0
    %1865 = vmatprep.subr.mxu0 0.0
    %1866 = vmatpush1.msra.mxu0 0.0
    %1867 = vmatprep.subr.mxu0 0.0
    %1868 = vmatpush1.msra.mxu0 0.0
    %1869 = vmatprep.subr.mxu0 0.0
    %1870 = vmatpush1.msra.mxu0 0.0
    %1871 = vmatprep.subr.mxu0 0.0
    %1872 = vmatpush1.msra.mxu0 0.0
    %1873 = vmatprep.subr.mxu0 0.0
    %1874 = vmatpush1.msra.mxu0 0.0
    %1875 = vmatprep.subr.mxu0 0.0
    %1876 = vmatpush1.msra.mxu0 0.0
    %1877 = vmatprep.subr.mxu0 0.0
    %1878 = vmatpush1.msra.mxu0 0.0
    %1879 = vmatprep.subr.mxu0 0.0
    %1880 = vmatpush1.msra.mxu0 0.0
    %1881 = vmatprep.subr.mxu0 0.0
    %1882 = vmatpush1.msra.mxu0 0.0
    %1883 = vmatprep.subr.mxu0 0.0
    %1884 = vmatpush1.msra.mxu0 0.0
    %1885 = vmatprep.subr.mxu0 0.0
    %1886 = vmatpush1.msra.mxu0 0.0
    %1887 = vmatprep.subr.mxu0 0.0
    %1888 = vmatpush1.msra.mxu0 0.0
    %1889 = vmatprep.subr.mxu0 0.0
    %1890 = vmatpush1.msra.mxu0 0.0
    %1891 = vmatprep.mubr.f32.mxu0 0.0
    %1892 = vmatmul.mubr.f32.gmra.mrb[0].mxu0 %v1825
    %v1893 = vpop.f32.mrb[0].mxu0
    %v1894 = vadd.f32 0.0, %v1893
    %v1895 = vpop.f32.mrb[0].mxu0
    %1896 = vdwg.mxu0
    %v1897 = vadd.f32 %v1826, %v1894
    %v1898 = vtanh.pop %v1897
    %v1899 = vld [vmem:[%s1028] sm:$0xff]
    %1900 = vmatprep.subr.mxu0 0.0
    %1901 = vmatpush1.msra.mxu0 %v1592
    %1902 = vmatprep.subr.mxu0 0.0
    %1903 = vmatpush1.msra.mxu0 %v1593
    %1904 = vmatprep.subr.mxu0 0.0
    %1905 = vmatpush1.msra.mxu0 %v1594
    %1906 = vmatprep.subr.mxu0 0.0
    %1907 = vmatpush1.msra.mxu0 %v1595
    %1908 = vmatprep.subr.mxu0 0.0
    %1909 = vmatpush1.msra.mxu0 %v1596
    %1910 = vmatprep.subr.mxu0 0.0
    %1911 = vmatpush1.msra.mxu0 %v1597
    %1912 = vmatprep.subr.mxu0 0.0
    %1913 = vmatpush1.msra.mxu0 %v1598
    %1914 = vmatprep.subr.mxu0 0.0
    %1915 = vmatpush1.msra.mxu0 %v1599
    %1916 = vmatprep.subr.mxu0 0.0
    %1917 = vmatpush1.msra.mxu0 %v1600
    %1918 = vmatprep.subr.mxu0 0.0
    %1919 = vmatpush1.msra.mxu0 %v1601
    %1920 = vmatprep.subr.mxu0 0.0
    %1921 = vmatpush1.msra.mxu0 %v1602
    %1922 = vmatprep.subr.mxu0 0.0
    %1923 = vmatpush1.msra.mxu0 %v1603
    %1924 = vmatprep.subr.mxu0 0.0
    %1925 = vmatpush1.msra.mxu0 %v1604
    %1926 = vmatprep.subr.mxu0 0.0
    %1927 = vmatpush1.msra.mxu0 %v1605
    %1928 = vmatprep.subr.mxu0 0.0
    %1929 = vmatpush1.msra.mxu0 %v1606
    %1930 = vmatprep.subr.mxu0 0.0
    %1931 = vmatpush1.msra.mxu0 %v1607
    %1932 = vmatprep.subr.mxu0 0.0
    %1933 = vmatpush1.msra.mxu0 0.0
    %1934 = vmatprep.subr.mxu0 0.0
    %1935 = vmatpush1.msra.mxu0 0.0
    %1936 = vmatprep.subr.mxu0 0.0
    %1937 = vmatpush1.msra.mxu0 0.0
    %1938 = vmatprep.subr.mxu0 0.0
    %1939 = vmatpush1.msra.mxu0 0.0
    %1940 = vmatprep.subr.mxu0 0.0
    %1941 = vmatpush1.msra.mxu0 0.0
    %1942 = vmatprep.subr.mxu0 0.0
    %1943 = vmatpush1.msra.mxu0 0.0
    %1944 = vmatprep.subr.mxu0 0.0
    %1945 = vmatpush1.msra.mxu0 0.0
    %1946 = vmatprep.subr.mxu0 0.0
    %1947 = vmatpush1.msra.mxu0 0.0
    %1948 = vmatprep.subr.mxu0 0.0
    %1949 = vmatpush1.msra.mxu0 0.0
    %1950 = vmatprep.subr.mxu0 0.0
    %1951 = vmatpush1.msra.mxu0 0.0
    %1952 = vmatprep.subr.mxu0 0.0
    %1953 = vmatpush1.msra.mxu0 0.0
    %1954 = vmatprep.subr.mxu0 0.0
    %1955 = vmatpush1.msra.mxu0 0.0
    %1956 = vmatprep.subr.mxu0 0.0
    %1957 = vmatpush1.msra.mxu0 0.0
    %1958 = vmatprep.subr.mxu0 0.0
    %1959 = vmatpush1.msra.mxu0 0.0
    %1960 = vmatprep.subr.mxu0 0.0
    %1961 = vmatpush1.msra.mxu0 0.0
    %1962 = vmatprep.subr.mxu0 0.0
    %1963 = vmatpush1.msra.mxu0 0.0
    %1964 = vmatprep.mubr.f32.mxu0 0.0
    %1965 = vmatmul.mubr.f32.gmra.mrb[0].mxu0 %v1898
    %v1966 = vpop.f32.mrb[0].mxu0
    %v1967 = vadd.f32 0.0, %v1966
    %v1968 = vpop.f32.mrb[0].mxu0
    %1969 = vdwg.mxu0
    %v1970 = vadd.f32 %v1899, %v1967
    %v1971 = vtanh.pop %v1970
    %v1972 = vld [vmem:[%s1215] sm:$0xff]
    %1973 = vmatprep.subr.mxu0 0.0
    %1974 = vmatpush1.msra.mxu0 %v1592
    %1975 = vmatprep.subr.mxu0 0.0
    %1976 = vmatpush1.msra.mxu0 %v1593
    %1977 = vmatprep.subr.mxu0 0.0
    %1978 = vmatpush1.msra.mxu0 %v1594
    %1979 = vmatprep.subr.mxu0 0.0
    %1980 = vmatpush1.msra.mxu0 %v1595
    %1981 = vmatprep.subr.mxu0 0.0
    %1982 = vmatpush1.msra.mxu0 %v1596
    %1983 = vmatprep.subr.mxu0 0.0
    %1984 = vmatpush1.msra.mxu0 %v1597
    %1985 = vmatprep.subr.mxu0 0.0
    %1986 = vmatpush1.msra.mxu0 %v1598
    %1987 = vmatprep.subr.mxu0 0.0
    %1988 = vmatpush1.msra.mxu0 %v1599
    %1989 = vmatprep.subr.mxu0 0.0
    %1990 = vmatpush1.msra.mxu0 %v1600
    %1991 = vmatprep.subr.mxu0 0.0
    %1992 = vmatpush1.msra.mxu0 %v1601
    %1993 = vmatprep.subr.mxu0 0.0
    %1994 = vmatpush1.msra.mxu0 %v1602
    %1995 = vmatprep.subr.mxu0 0.0
    %1996 = vmatpush1.msra.mxu0 %v1603
    %1997 = vmatprep.subr.mxu0 0.0
    %1998 = vmatpush1.msra.mxu0 %v1604
    %1999 = vmatprep.subr.mxu0 0.0
    %2000 = vmatpush1.msra.mxu0 %v1605
    %2001 = vmatprep.subr.mxu0 0.0
    %2002 = vmatpush1.msra.mxu0 %v1606
    %2003 = vmatprep.subr.mxu0 0.0
    %2004 = vmatpush1.msra.mxu0 %v1607
    %2005 = vmatprep.subr.mxu0 0.0
    %2006 = vmatpush1.msra.mxu0 0.0
    %2007 = vmatprep.subr.mxu0 0.0
    %2008 = vmatpush1.msra.mxu0 0.0
    %2009 = vmatprep.subr.mxu0 0.0
    %2010 = vmatpush1.msra.mxu0 0.0
    %2011 = vmatprep.subr.mxu0 0.0
    %2012 = vmatpush1.msra.mxu0 0.0
    %2013 = vmatprep.subr.mxu0 0.0
    %2014 = vmatpush1.msra.mxu0 0.0
    %2015 = vmatprep.subr.mxu0 0.0
    %2016 = vmatpush1.msra.mxu0 0.0
    %2017 = vmatprep.subr.mxu0 0.0
    %2018 = vmatpush1.msra.mxu0 0.0
    %2019 = vmatprep.subr.mxu0 0.0
    %2020 = vmatpush1.msra.mxu0 0.0
    %2021 = vmatprep.subr.mxu0 0.0
    %2022 = vmatpush1.msra.mxu0 0.0
    %2023 = vmatprep.subr.mxu0 0.0
    %2024 = vmatpush1.msra.mxu0 0.0
    %2025 = vmatprep.subr.mxu0 0.0
    %2026 = vmatpush1.msra.mxu0 0.0
    %2027 = vmatprep.subr.mxu0 0.0
    %2028 = vmatpush1.msra.mxu0 0.0
    %2029 = vmatprep.subr.mxu0 0.0
    %2030 = vmatpush1.msra.mxu0 0.0
    %2031 = vmatprep.subr.mxu0 0.0
    %2032 = vmatpush1.msra.mxu0 0.0
    %2033 = vmatprep.subr.mxu0 0.0
    %2034 = vmatpush1.msra.mxu0 0.0
    %2035 = vmatprep.subr.mxu0 0.0
    %2036 = vmatpush1.msra.mxu0 0.0
    %2037 = vmatprep.mubr.f32.mxu0 0.0
    %2038 = vmatmul.mubr.f32.gmra.mrb[0].mxu0 %v1971
    %v2039 = vpop.f32.mrb[0].mxu0
    %v2040 = vadd.f32 0.0, %v2039
    %v2041 = vpop.f32.mrb[0].mxu0
    %2042 = vdwg.mxu0
    %v2043 = vadd.f32 %v1972, %v2040
    %v2044 = vtanh.pop %v2043
    %v2045 = vld [vmem:[%s1402] sm:$0xff]
    %2046 = vmatprep.subr.mxu0 0.0
    %2047 = vmatpush1.msra.mxu0 %v1592
    %2048 = vmatprep.subr.mxu0 0.0
    %2049 = vmatpush1.msra.mxu0 %v1593
    %2050 = vmatprep.subr.mxu0 0.0
    %2051 = vmatpush1.msra.mxu0 %v1594
    %2052 = vmatprep.subr.mxu0 0.0
    %2053 = vmatpush1.msra.mxu0 %v1595
    %2054 = vmatprep.subr.mxu0 0.0
    %2055 = vmatpush1.msra.mxu0 %v1596
    %2056 = vmatprep.subr.mxu0 0.0
    %2057 = vmatpush1.msra.mxu0 %v1597
    %2058 = vmatprep.subr.mxu0 0.0
    %2059 = vmatpush1.msra.mxu0 %v1598
    %2060 = vmatprep.subr.mxu0 0.0
    %2061 = vmatpush1.msra.mxu0 %v1599
    %2062 = vmatprep.subr.mxu0 0.0
    %2063 = vmatpush1.msra.mxu0 %v1600
    %2064 = vmatprep.subr.mxu0 0.0
    %2065 = vmatpush1.msra.mxu0 %v1601
    %2066 = vmatprep.subr.mxu0 0.0
    %2067 = vmatpush1.msra.mxu0 %v1602
    %2068 = vmatprep.subr.mxu0 0.0
    %2069 = vmatpush1.msra.mxu0 %v1603
    %2070 = vmatprep.subr.mxu0 0.0
    %2071 = vmatpush1.msra.mxu0 %v1604
    %2072 = vmatprep.subr.mxu0 0.0
    %2073 = vmatpush1.msra.mxu0 %v1605
    %2074 = vmatprep.subr.mxu0 0.0
    %2075 = vmatpush1.msra.mxu0 %v1606
    %2076 = vmatprep.subr.mxu0 0.0
    %2077 = vmatpush1.msra.mxu0 %v1607
    %2078 = vmatprep.subr.mxu0 0.0
    %2079 = vmatpush1.msra.mxu0 0.0
    %2080 = vmatprep.subr.mxu0 0.0
    %2081 = vmatpush1.msra.mxu0 0.0
    %2082 = vmatprep.subr.mxu0 0.0
    %2083 = vmatpush1.msra.mxu0 0.0
    %2084 = vmatprep.subr.mxu0 0.0
    %2085 = vmatpush1.msra.mxu0 0.0
    %2086 = vmatprep.subr.mxu0 0.0
    %2087 = vmatpush1.msra.mxu0 0.0
    %2088 = vmatprep.subr.mxu0 0.0
    %2089 = vmatpush1.msra.mxu0 0.0
    %2090 = vmatprep.subr.mxu0 0.0
    %2091 = vmatpush1.msra.mxu0 0.0
    %2092 = vmatprep.subr.mxu0 0.0
    %2093 = vmatpush1.msra.mxu0 0.0
    %2094 = vmatprep.subr.mxu0 0.0
    %2095 = vmatpush1.msra.mxu0 0.0
    %2096 = vmatprep.subr.mxu0 0.0
    %2097 = vmatpush1.msra.mxu0 0.0
    %2098 = vmatprep.subr.mxu0 0.0
    %2099 = vmatpush1.msra.mxu0 0.0
    %2100 = vmatprep.subr.mxu0 0.0
    %2101 = vmatpush1.msra.mxu0 0.0
    %2102 = vmatprep.subr.mxu0 0.0
    %2103 = vmatpush1.msra.mxu0 0.0
    %2104 = vmatprep.subr.mxu0 0.0
    %2105 = vmatpush1.msra.mxu0 0.0
    %2106 = vmatprep.subr.mxu0 0.0
    %2107 = vmatpush1.msra.mxu0 0.0
    %2108 = vmatprep.subr.mxu0 0.0
    %2109 = vmatpush1.msra.mxu0 0.0
    %2110 = vmatprep.mubr.f32.mxu0 0.0
    %2111 = vmatmul.mubr.f32.gmra.mrb[0].mxu0 %v2044
    %v2112 = vpop.f32.mrb[0].mxu0
    %v2113 = vadd.f32 0.0, %v2112
    %v2114 = vpop.f32.mrb[0].mxu0
    %2115 = vdwg.mxu0
    %v2116 = vadd.f32 %v2045, %v2113
    %v2117 = vtanh.pop %v2116
    %v2118 = vld [vmem:[%s1589] sm:$0xff]
    %2119 = vmatprep.subr.mxu0 0.0
    %2120 = vmatpush1.msra.mxu0 %v1592
    %2121 = vmatprep.subr.mxu0 0.0
    %2122 = vmatpush1.msra.mxu0 %v1593
    %2123 = vmatprep.subr.mxu0 0.0
    %2124 = vmatpush1.msra.mxu0 %v1594
    %2125 = vmatprep.subr.mxu0 0.0
    %2126 = vmatpush1.msra.mxu0 %v1595
    %2127 = vmatprep.subr.mxu0 0.0
    %2128 = vmatpush1.msra.mxu0 %v1596
    %2129 = vmatprep.subr.mxu0 0.0
    %2130 = vmatpush1.msra.mxu0 %v1597
    %2131 = vmatprep.subr.mxu0 0.0
    %2132 = vmatpush1.msra.mxu0 %v1598
    %2133 = vmatprep.subr.mxu0 0.0
    %2134 = vmatpush1.msra.mxu0 %v1599
    %2135 = vmatprep.subr.mxu0 0.0
    %2136 = vmatpush1.msra.mxu0 %v1600
    %2137 = vmatprep.subr.mxu0 0.0
    %2138 = vmatpush1.msra.mxu0 %v1601
    %2139 = vmatprep.subr.mxu0 0.0
    %2140 = vmatpush1.msra.mxu0 %v1602
    %2141 = vmatprep.subr.mxu0 0.0
    %2142 = vmatpush1.msra.mxu0 %v1603
    %2143 = vmatprep.subr.mxu0 0.0
    %2144 = vmatpush1.msra.mxu0 %v1604
    %2145 = vmatprep.subr.mxu0 0.0
    %2146 = vmatpush1.msra.mxu0 %v1605
    %2147 = vmatprep.subr.mxu0 0.0
    %2148 = vmatpush1.msra.mxu0 %v1606
    %2149 = vmatprep.subr.mxu0 0.0
    %2150 = vmatpush1.msra.mxu0 %v1607
    %2151 = vmatprep.subr.mxu0 0.0
    %2152 = vmatpush1.msra.mxu0 0.0
    %2153 = vmatprep.subr.mxu0 0.0
    %2154 = vmatpush1.msra.mxu0 0.0
    %2155 = vmatprep.subr.mxu0 0.0
    %2156 = vmatpush1.msra.mxu0 0.0
    %2157 = vmatprep.subr.mxu0 0.0
    %2158 = vmatpush1.msra.mxu0 0.0
    %2159 = vmatprep.subr.mxu0 0.0
    %2160 = vmatpush1.msra.mxu0 0.0
    %2161 = vmatprep.subr.mxu0 0.0
    %2162 = vmatpush1.msra.mxu0 0.0
    %2163 = vmatprep.subr.mxu0 0.0
    %2164 = vmatpush1.msra.mxu0 0.0
    %2165 = vmatprep.subr.mxu0 0.0
    %2166 = vmatpush1.msra.mxu0 0.0
    %2167 = vmatprep.subr.mxu0 0.0
    %2168 = vmatpush1.msra.mxu0 0.0
    %2169 = vmatprep.subr.mxu0 0.0
    %2170 = vmatpush1.msra.mxu0 0.0
    %2171 = vmatprep.subr.mxu0 0.0
    %2172 = vmatpush1.msra.mxu0 0.0
    %2173 = vmatprep.subr.mxu0 0.0
    %2174 = vmatpush1.msra.mxu0 0.0
    %2175 = vmatprep.subr.mxu0 0.0
    %2176 = vmatpush1.msra.mxu0 0.0
    %2177 = vmatprep.subr.mxu0 0.0
    %2178 = vmatpush1.msra.mxu0 0.0
    %2179 = vmatprep.subr.mxu0 0.0
    %2180 = vmatpush1.msra.mxu0 0.0
    %2181 = vmatprep.subr.mxu0 0.0
    %2182 = vmatpush1.msra.mxu0 0.0
    %2183 = vmatprep.mubr.f32.mxu0 0.0
    %2184 = vmatmul.mubr.f32.gmra.mrb[0].mxu0 %v2117
    %v2185 = vpop.f32.mrb[0].mxu0
    %v2186 = vadd.f32 0.0, %v2185
    %v2187 = vpop.f32.mrb[0].mxu0
    %2188 = vdwg.mxu0
    %v2189 = vadd.f32 %v2118, %v2186
    %v2190 = vtanh.pop %v2189
    %v2191 = vld [vmem:[#allocation11] sm:$0xff]
    %v2192 = vld [vmem:[#allocation11 + $0x8] sm:$0xff]
    %v2193 = vld [vmem:[#allocation11 + $0x10] sm:$0xff]
    %v2194 = vld [vmem:[#allocation11 + $0x18] sm:$0xff]
    %v2195 = vld [vmem:[#allocation11 + $0x20] sm:$0xff]
    %v2196 = vld [vmem:[#allocation11 + $0x28] sm:$0xff]
    %v2197 = vld [vmem:[#allocation11 + $0x30] sm:$0xff]
    %v2198 = vld [vmem:[#allocation11 + $0x38] sm:$0xff]
    %v2199 = vld [vmem:[#allocation11 + $0x40] sm:$0xff]
    %v2200 = vld [vmem:[#allocation11 + $0x48] sm:$0xff]
    %v2201 = vld [vmem:[#allocation11 + $0x50] sm:$0xff]
    %v2202 = vld [vmem:[#allocation11 + $0x58] sm:$0xff]
    %v2203 = vld [vmem:[#allocation11 + $0x60] sm:$0xff]
    %v2204 = vld [vmem:[#allocation11 + $0x68] sm:$0xff]
    %v2205 = vld [vmem:[#allocation11 + $0x70] sm:$0xff]
    %v2206 = vld [vmem:[#allocation11 + $0x78] sm:$0xff]
    %v2207 = vld [vmem:[%s6] sm:$0x1]
    %v2209 = vlaneseq
    %v2210 = vshrl.u32 %v2209, 7
    %v2211 = vsub.s32 0, %v2210
    %v2212 = vrot.slane %v2207, %v2211
    %2214 = vmatprep.subr.mxu0 0.0
    %2215 = vmatpush1.msra.mxu0 %v2191
    %2216 = vmatprep.subr.mxu0 0.0
    %2217 = vmatpush1.msra.mxu0 %v2192
    %2218 = vmatprep.subr.mxu0 0.0
    %2219 = vmatpush1.msra.mxu0 %v2193
    %2220 = vmatprep.subr.mxu0 0.0
    %2221 = vmatpush1.msra.mxu0 %v2194
    %2222 = vmatprep.subr.mxu0 0.0
    %2223 = vmatpush1.msra.mxu0 %v2195
    %2224 = vmatprep.subr.mxu0 0.0
    %2225 = vmatpush1.msra.mxu0 %v2196
    %2226 = vmatprep.subr.mxu0 0.0
    %2227 = vmatpush1.msra.mxu0 %v2197
    %2228 = vmatprep.subr.mxu0 0.0
    %2229 = vmatpush1.msra.mxu0 %v2198
    %2230 = vmatprep.subr.mxu0 0.0
    %2231 = vmatpush1.msra.mxu0 %v2199
    %2232 = vmatprep.subr.mxu0 0.0
    %2233 = vmatpush1.msra.mxu0 %v2200
    %2234 = vmatprep.subr.mxu0 0.0
    %2235 = vmatpush1.msra.mxu0 %v2201
    %2236 = vmatprep.subr.mxu0 0.0
    %2237 = vmatpush1.msra.mxu0 %v2202
    %2238 = vmatprep.subr.mxu0 0.0
    %2239 = vmatpush1.msra.mxu0 %v2203
    %2240 = vmatprep.subr.mxu0 0.0
    %2241 = vmatpush1.msra.mxu0 %v2204
    %2242 = vmatprep.subr.mxu0 0.0
    %2243 = vmatpush1.msra.mxu0 %v2205
    %2244 = vmatprep.subr.mxu0 0.0
    %2245 = vmatpush1.msra.mxu0 %v2206
    %2246 = vmatprep.subr.mxu0 0.0
    %2247 = vmatpush1.msra.mxu0 0.0
    %2248 = vmatprep.subr.mxu0 0.0
    %2249 = vmatpush1.msra.mxu0 0.0
    %2250 = vmatprep.subr.mxu0 0.0
    %2251 = vmatpush1.msra.mxu0 0.0
    %2252 = vmatprep.subr.mxu0 0.0
    %2253 = vmatpush1.msra.mxu0 0.0
    %2254 = vmatprep.subr.mxu0 0.0
    %2255 = vmatpush1.msra.mxu0 0.0
    %2256 = vmatprep.subr.mxu0 0.0
    %2257 = vmatpush1.msra.mxu0 0.0
    %2258 = vmatprep.subr.mxu0 0.0
    %2259 = vmatpush1.msra.mxu0 0.0
    %2260 = vmatprep.subr.mxu0 0.0
    %2261 = vmatpush1.msra.mxu0 0.0
    %2262 = vmatprep.subr.mxu0 0.0
    %2263 = vmatpush1.msra.mxu0 0.0
    %2264 = vmatprep.subr.mxu0 0.0
    %2265 = vmatpush1.msra.mxu0 0.0
    %2266 = vmatprep.subr.mxu0 0.0
    %2267 = vmatpush1.msra.mxu0 0.0
    %2268 = vmatprep.subr.mxu0 0.0
    %2269 = vmatpush1.msra.mxu0 0.0
    %2270 = vmatprep.subr.mxu0 0.0
    %2271 = vmatpush1.msra.mxu0 0.0
    %2272 = vmatprep.subr.mxu0 0.0
    %2273 = vmatpush1.msra.mxu0 0.0
    %2274 = vmatprep.subr.mxu0 0.0
    %2275 = vmatpush1.msra.mxu0 0.0
    %2276 = vmatprep.subr.mxu0 0.0
    %2277 = vmatpush1.msra.mxu0 0.0
    %2278 = vmatprep.mubr.f32.mxu0 0.0
    %2279 = vmatmul.mubr.f32.gmra.mrb[0].mxu0 %v2190
    %v2280 = vpop.f32.mrb[0].mxu0
    %v2281 = vadd.f32 %v2212, %v2280
    %v2282 = vpop.f32.mrb[0].mxu0
    %2283 = vdwg.mxu0
    %2284 = vst [vmem:[#allocation12] sm:$0xff] %v2281
    // Predicated region
    $region50: #{tpu_custom_call.1} parent=1 // pred_check
      _
    $region51: #{tpu_custom_call.1} parent=1 // pred_check_branch
      %2286 = sbr.rel (0) target = $region53
    $region52: #{tpu_custom_call.1} parent=1 // pred_region
      %s2288 = ssub.s32 128, 128
      %2289 = vsyncadd [#allocation5], %s2288
      %s2291 = sshll.u32 [#allocation12], 4
      %s2292 = int_to_ptr.vmem [resolvable:$true] %s2291
      %2294 = dma.vmem_to_hbm [thread:$0]  %s2292, 128, %s7, [#allocation5]
    $region53: #{tpu_custom_call.1} parent=1 // pred_fallthru
      _
    // Predicated region
    $region54: #{tpu_custom_call.1} parent=1 // pred_check
      _
    $region55: #{tpu_custom_call.1} parent=1 // pred_check_branch
      %2296 = sbr.rel (0) target = $region57
    $region56: #{tpu_custom_call.1} parent=1 // pred_region
      %2297 = dma.done [#allocation5], 128
    $region57: #{tpu_custom_call.1} parent=1 // pred_fallthru
      _
    %2298 = vsyncpa [#allocation4], 1
    %2299 = vsyncpa [#allocation7], 1
    %2300 = vsyncpa [#allocation10], 1
    %2301 = vsyncpa [#allocation5], 1

</llo_original>
